<compile_context>
chip_gen: v6e
topology: v6e:2x2x1
jax: 0.10.0
libtpu: 0.0.40
codegen_flags: <defaults>
</compile_context>

<pallas_src>
import functools

import jax
import jax.numpy as jnp
from jax import lax
from jax.experimental import pallas as pl
from jax.experimental.pallas import tpu as pltpu

_BN_EPS = 1e-5


# ----------------------------------------------------------------------------
# Fused Bottleneck kernel: one grid step = one (th, W, C3) output slab
# ----------------------------------------------------------------------------
def _bottleneck_kernel(x_top_ref, x_body_ref, x_bot_ref,
                       w1_ref, s1_ref, t1_ref,
                       w2_ref, s2_ref, t2_ref,
                       w3_ref, s3_ref, t3_ref,
                       o_ref, *, th, w):
    i = pl.program_id(1)
    n_row_blocks = pl.num_programs(1)

    cin = x_body_ref.shape[-1]
    c1 = w1_ref.shape[-1]
    c2 = w2_ref.shape[-1]
    c3 = w3_ref.shape[-1]

    # --- conv1 + bn1 + relu: ONE MXU dot over all (th+2)*w rows -------------
    x_all = jnp.concatenate(
        [x_top_ref[0], x_body_ref[0], x_bot_ref[0]], axis=0)   # (th+2, w, cin) bf16
    y1 = jnp.dot(x_all.reshape((th + 2) * w, cin), w1_ref[...],
                 preferred_element_type=jnp.float32)
    y1 = jnp.maximum(y1 * s1_ref[...] + t1_ref[...], 0.0)
    y1 = y1.astype(jnp.bfloat16).reshape(th + 2, w, c1)         # bf16 early

    # Halo rows that fall outside the image are conv2's zero padding.
    rid = lax.broadcasted_iota(jnp.int32, (th + 2, 1, 1), 0)
    row_ok = jnp.logical_and(
        jnp.logical_or(rid != 0, i > 0),
        jnp.logical_or(rid != th + 1, i < n_row_blocks - 1))
    y1 = y1 * row_ok.astype(jnp.bfloat16)

    # Zero-pad width (bf16) and build the width-shifted buffer ONCE for all
    # th+2 rows; per-dy slices below are sublane-aligned row windows.
    zcol = jnp.zeros((th + 2, 1, c1), jnp.bfloat16)
    y1p = jnp.concatenate([zcol, y1, zcol], axis=1)             # (th+2, w+2, c1)
    shifted = jnp.concatenate(
        [y1p[:, 0:w], y1p[:, 1:w + 1], y1p[:, 2:w + 2]], axis=-1)  # (th+2, w, 3*c1)

    # --- conv2 (3x3, pad=1, stride=1): 3 MXU dots, one per kernel row -------
    acc = None
    for dy in range(3):
        a = shifted[dy:dy + th].reshape(th * w, 3 * c1)
        d = jnp.dot(a, w2_ref[dy], preferred_element_type=jnp.float32)
        acc = d if acc is None else acc + d
    y2 = jnp.maximum(acc * s2_ref[...] + t2_ref[...], 0.0).astype(jnp.bfloat16)

    # --- conv3 (1x1) + bn3 + identity residual + relu -----------------------
    y3 = jnp.dot(y2, w3_ref[...], preferred_element_type=jnp.float32)
    y3 = y3 * s3_ref[...] + t3_ref[...]
    y3 = y3 + x_body_ref[0].reshape(th * w, cin).astype(jnp.float32)
    o_ref[0] = jnp.maximum(y3, 0.0).reshape(th, w, c3).astype(o_ref.dtype)


# ----------------------------------------------------------------------------
# Helpers
# ----------------------------------------------------------------------------
def _fold_bn(gamma, beta, mean, var, eps=_BN_EPS):
    scale = gamma / jnp.sqrt(var + eps)
    shift = beta - mean * scale
    return scale[None, :].astype(jnp.float32), shift[None, :].astype(jnp.float32)


def _tpu_vmem_capacity_bytes():
    try:
        info = pltpu.get_tpu_info()
        cap = getattr(info, "vmem_capacity_bytes", None)
        if cap:
            return int(cap)
    except Exception:
        pass
    return 64 << 20  # conservative (v7x-sized) default


def _num_tensorcores():
    try:
        info = pltpu.get_tpu_info()
        for name in ("tensorcores_per_chip", "num_cores", "core_count"):
            v = getattr(info, name, None)
            if v:
                return max(1, min(int(v), 2))   # TPU chips have 1 or 2 TCs
    except Exception:
        pass
    return 1


def _pick_row_tile(n, h, w, cin, c1, c2, c3, *, out_bytes, vmem_budget,
                   min_steps):
    """Largest divisor of h whose per-step VMEM estimate (double-buffered I/O,
    resident weights, and in-kernel temporaries) fits the budget, preferring
    enough grid steps for pipelining / megacore sharding."""
    divs = sorted((d for d in range(1, h + 1) if h % d == 0), reverse=True)

    def est(th):
        m = (th + 2) * w
        x_in = 2 * m * cin * 2                              # bf16 input, 2x buffered
        out = 2 * th * w * c3 * out_bytes                   # output, 2x buffered
        wts = 2 * (cin * c1 + 9 * c1 * c2 + c2 * c3) * 2    # bf16 weights, 2x buffered
        tmp = (m * cin * 2                                  # conv1 input concat
               + m * c1 * (4 + 2)                           # conv1 f32 result + bf16 copy
               + (th + 2) * (w + 2) * c1 * 2                # width-padded buffer
               + 2 * m * 3 * c1 * 2                         # shifted buffer + dot operand
               + th * w * c2 * (4 + 2)                      # conv2 f32 acc + bf16 copy
               + th * w * c3 * 4)                           # conv3 f32 result
        return x_in + out + wts + tmp

    fitting = [d for d in divs if est(d) <= vmem_budget] or [1]
    for d in fitting:
        if n * (h // d) >= min_steps:
            return d
    return fitting[0]


def init_bottleneck_params(key, in_channels, out_channels, expansion=4):
    c1 = c2 = out_channels
    c3 = out_channels * expansion
    ks = jax.random.split(key, 6)

    def bn_params(k, c):
        k0, k1, k2, k3 = jax.random.split(k, 4)
        gamma = 1.0 + 0.1 * jax.random.normal(k0, (c,), jnp.float32)
        beta = 0.1 * jax.random.normal(k1, (c,), jnp.float32)
        mean = 0.1 * jax.random.normal(k2, (c,), jnp.float32)
        var = 1.0 + 0.1 * jax.random.uniform(k3, (c,), jnp.float32)
        return gamma, beta, mean, var

    p = {}
    p["w1"] = 0.1 * jax.random.normal(ks[0], (in_channels, c1), jnp.float32)
    p["g1"], p["b1"], p["m1"], p["v1"] = bn_params(ks[1], c1)
    p["w2"] = 0.1 * jax.random.normal(ks[2], (3, 3, c1, c2), jnp.float32)
    p["g2"], p["b2"], p["m2"], p["v2"] = bn_params(ks[3], c2)
    p["w3"] = 0.1 * jax.random.normal(ks[4], (c2, c3), jnp.float32)
    p["g3"], p["b3"], p["m3"], p["v3"] = bn_params(ks[5], c3)
    return p


# ----------------------------------------------------------------------------
# Forward pass
# ----------------------------------------------------------------------------
def bottleneck_forward(x, params, *, stride=1, data_format="NCHW",
                       out_dtype=jnp.bfloat16):
    if stride != 1:
        # TODO(synk): stride != 1 needs the downsample projection shortcut.
        raise NotImplementedError("only stride=1 / downsample=None is supported")

    if data_format == "NCHW":
        # TODO(synk): callers holding NHWC should pass data_format="NHWC" and
        # skip this extra HBM transpose pass (and the one on the way out).
        x = jnp.transpose(x, (0, 2, 3, 1))
    n, h, w, cin = x.shape

    c1 = params["w1"].shape[1]
    c2 = params["w2"].shape[-1]
    c3 = params["w3"].shape[1]
    if cin != c3:
        raise NotImplementedError(
            "identity shortcut requires in_channels == out_channels * expansion")

    s1, t1 = _fold_bn(params["g1"], params["b1"], params["m1"], params["v1"])
    s2, t2 = _fold_bn(params["g2"], params["b2"], params["m2"], params["v2"])
    s3, t3 = _fold_bn(params["g3"], params["b3"], params["m3"], params["v3"])

    x_bf16 = x.astype(jnp.bfloat16)
    w1 = params["w1"].astype(jnp.bfloat16)
    w2 = params["w2"].reshape(3, 3 * c1, c2).astype(jnp.bfloat16)  # dy, dx*c1+ci
    w3 = params["w3"].astype(jnp.bfloat16)

    # Generation-aware VMEM sizing (128 MiB chips -> 96/48 MiB, v7x -> 48/24).
    out_bytes = jnp.dtype(out_dtype).itemsize
    vmem_cap = _tpu_vmem_capacity_bytes()
    vmem_limit = min((3 * vmem_cap) // 4, 96 << 20)
    vmem_budget = vmem_limit // 2
    min_steps = 4 * _num_tensorcores()

    th = _pick_row_tile(n, h, w, cin, c1, c2, c3, out_bytes=out_bytes,
                        vmem_budget=vmem_budget, min_steps=min_steps)
    grid = (n, h // th)

    const2 = lambda b, i: (0, 0)
    const3 = lambda b, i: (0, 0, 0)

    wt_elems = cin * c1 + 9 * c1 * c2 + c2 * c3
    cost = pl.CostEstimate(
        flops=2 * n * h * w * wt_elems,
        transcendentals=0,
        bytes_accessed=(n * h * w * cin * 2 + n * h * w * c3 * out_bytes
                        + wt_elems * 2 + 8 * (c1 + c2 + c3)))

    out = pl.pallas_call(
        functools.partial(_bottleneck_kernel, th=th, w=w),
        out_shape=jax.ShapeDtypeStruct((n, h, w, c3), out_dtype),
        grid_spec=pltpu.PrefetchScalarGridSpec(
            num_scalar_prefetch=0,
            grid=grid,
            in_specs=[
                # top halo row (clamped at the image border; zeroed in-kernel)
                pl.BlockSpec((1, 1, w, cin),
                             lambda b, i: (b, jnp.maximum(i * th - 1, 0), 0, 0)),
                # body rows
                pl.BlockSpec((1, th, w, cin), lambda b, i: (b, i, 0, 0)),
                # bottom halo row
                pl.BlockSpec((1, 1, w, cin),
                             lambda b, i: (b, jnp.minimum(i * th + th, h - 1), 0, 0)),
                # weights and folded BN params (constant index -> no per-step
                # re-DMA; double-buffer footprint accounted for in the budget)
                pl.BlockSpec((cin, c1), const2),
                pl.BlockSpec((1, c1), const2),
                pl.BlockSpec((1, c1), const2),
                pl.BlockSpec((3, 3 * c1, c2), const3),
                pl.BlockSpec((1, c2), const2),
                pl.BlockSpec((1, c2), const2),
                pl.BlockSpec((c2, c3), const2),
                pl.BlockSpec((1, c3), const2),
                pl.BlockSpec((1, c3), const2),
            ],
            out_specs=pl.BlockSpec((1, th, w, c3), lambda b, i: (b, i, 0, 0)),
        ),
        compiler_params=pltpu.CompilerParams(
            dimension_semantics=("parallel", "parallel"),
            vmem_limit_bytes=vmem_limit),
        cost_estimate=cost,
    )(x_bf16, x_bf16, x_bf16, w1, s1, t1, w2, s2, t2, w3, s3, t3)

    if data_format == "NCHW":
        out = jnp.transpose(out, (0, 3, 1, 2))
    return out


# ----------------------------------------------------------------------------
# Pure-JAX reference (same numerics: bf16 matmul inputs, f32 accumulation,
# bf16 output rounding)
# ----------------------------------------------------------------------------
def bottleneck_reference(x_nchw, p, eps=_BN_EPS, out_dtype=jnp.bfloat16):
    x = jnp.transpose(x_nchw, (0, 2, 3, 1)).astype(jnp.float32)
    xb = x.astype(jnp.bfloat16)

    s1, t1 = _fold_bn(p["g1"], p["b1"], p["m1"], p["v1"], eps)
    s2, t2 = _fold_bn(p["g2"], p["b2"], p["m2"], p["v2"], eps)
    s3, t3 = _fold_bn(p["g3"], p["b3"], p["m3"], p["v3"], eps)

    y = jnp.einsum("nhwc,cd->nhwd", xb, p["w1"].astype(jnp.bfloat16),
                   preferred_element_type=jnp.float32)
    y = jax.nn.relu(y * s1 + t1)
    y = lax.conv_general_dilated(
        y.astype(jnp.bfloat16), p["w2"].astype(jnp.bfloat16), (1, 1), "SAME",
        dimension_numbers=("NHWC", "HWIO", "NHWC"),
        preferred_element_type=jnp.float32)
    y = jax.nn.relu(y * s2 + t2)
    y = jnp.einsum("nhwc,cd->nhwd", y.astype(jnp.bfloat16),
                   p["w3"].astype(jnp.bfloat16),
                   preferred_element_type=jnp.float32)
    y = y * s3 + t3
    y = jax.nn.relu(y + xb.astype(jnp.float32))
    y = y.astype(out_dtype).astype(jnp.float32)
    return jnp.transpose(y, (0, 3, 1, 2))


if __name__ == "__main__":
    key = jax.random.PRNGKey(0)
    k_x, k_p = jax.random.split(key)

    # Identity shortcut requires in_channels == out_channels * expansion.
    # Channels picked so the final store is lane-dense (C3 = 128).
    N, IN_C, H, W = 2, 128, 16, 16
    OUT_C = 32                                 # conv3 emits OUT_C * 4 == IN_C

    x = jax.random.normal(k_x, (N, IN_C, H, W), jnp.float32)
    params = init_bottleneck_params(k_p, IN_C, OUT_C)

    fwd = jax.jit(bottleneck_forward)
    out = jax.block_until_ready(fwd(x, params))
    ref = jax.block_until_ready(bottleneck_reference(x, params))

    assert out.shape == (N, IN_C, H, W), out.shape
    out_f32 = out.astype(jnp.float32)
    max_err = float(jnp.max(jnp.abs(out_f32 - ref)))
    assert jnp.allclose(out_f32, ref, atol=2e-2, rtol=2e-2), max_err

    print("KERNEL_OK")
</pallas_src>

<mosaic_0001>
module attributes {stable_mosaic.version = 11 : i64} {
  func.func @_bottleneck_kernel(%arg0: i32, %arg1: i32, %arg2: memref<1x1x16x128xbf16, #tpu.memory_space<vmem>>, %arg3: memref<1x8x16x128xbf16, #tpu.memory_space<vmem>>, %arg4: memref<1x1x16x128xbf16, #tpu.memory_space<vmem>>, %arg5: memref<128x32xbf16, #tpu.memory_space<vmem>>, %arg6: memref<1x32xf32, #tpu.memory_space<vmem>>, %arg7: memref<1x32xf32, #tpu.memory_space<vmem>>, %arg8: memref<3x96x32xbf16, #tpu.memory_space<vmem>>, %arg9: memref<1x32xf32, #tpu.memory_space<vmem>>, %arg10: memref<1x32xf32, #tpu.memory_space<vmem>>, %arg11: memref<32x128xbf16, #tpu.memory_space<vmem>>, %arg12: memref<1x128xf32, #tpu.memory_space<vmem>>, %arg13: memref<1x128xf32, #tpu.memory_space<vmem>>, %arg14: memref<1x8x16x128xbf16, #tpu.memory_space<vmem>>) attributes {dimension_semantics = [#tpu.dimension_semantics<parallel>, #tpu.dimension_semantics<parallel>], iteration_bounds = array<i64: 2, 2>, scalar_prefetch = 0 : i64, scratch_operands = 0 : i64, tpu.core_type = #tpu.core_type<tc>, window_params = [{transform_indices = @transform_0, window_bounds = array<i64: 1, 1, 16, 128>}, {transform_indices = @transform_1, window_bounds = array<i64: 1, 8, 16, 128>}, {transform_indices = @transform_2, window_bounds = array<i64: 1, 1, 16, 128>}, {pipeline_mode = #tpu.pipeline_mode<synchronous>, transform_indices = @transform_3, window_bounds = array<i64: 128, 32>}, {pipeline_mode = #tpu.pipeline_mode<synchronous>, transform_indices = @transform_4, window_bounds = array<i64: 1, 32>}, {pipeline_mode = #tpu.pipeline_mode<synchronous>, transform_indices = @transform_5, window_bounds = array<i64: 1, 32>}, {pipeline_mode = #tpu.pipeline_mode<synchronous>, transform_indices = @transform_6, window_bounds = array<i64: 3, 96, 32>}, {pipeline_mode = #tpu.pipeline_mode<synchronous>, transform_indices = @transform_7, window_bounds = array<i64: 1, 32>}, {pipeline_mode = #tpu.pipeline_mode<synchronous>, transform_indices = @transform_8, window_bounds = array<i64: 1, 32>}, {pipeline_mode = #tpu.pipeline_mode<synchronous>, transform_indices = @transform_9, window_bounds = array<i64: 32, 128>}, {pipeline_mode = #tpu.pipeline_mode<synchronous>, transform_indices = @transform_10, window_bounds = array<i64: 1, 128>}, {pipeline_mode = #tpu.pipeline_mode<synchronous>, transform_indices = @transform_11, window_bounds = array<i64: 1, 128>}, {transform_indices = @transform_12, window_bounds = array<i64: 1, 8, 16, 128>}]} {
    %c0 = arith.constant 0 : index
    %c0_0 = arith.constant 0 : index
    %c0_1 = arith.constant 0 : index
    %c0_2 = arith.constant 0 : index
    %0 = vector.load %arg2[%c0, %c0_0, %c0_1, %c0_2] : memref<1x1x16x128xbf16, #tpu.memory_space<vmem>>, vector<1x1x16x128xbf16>
    %1 = vector.shape_cast %0 : vector<1x1x16x128xbf16> to vector<1x16x128xbf16>
    %c0_3 = arith.constant 0 : index
    %c0_4 = arith.constant 0 : index
    %c0_5 = arith.constant 0 : index
    %c0_6 = arith.constant 0 : index
    %2 = vector.load %arg3[%c0_3, %c0_4, %c0_5, %c0_6] : memref<1x8x16x128xbf16, #tpu.memory_space<vmem>>, vector<1x8x16x128xbf16>
    %3 = vector.shape_cast %2 : vector<1x8x16x128xbf16> to vector<8x16x128xbf16>
    %c0_7 = arith.constant 0 : index
    %c0_8 = arith.constant 0 : index
    %c0_9 = arith.constant 0 : index
    %c0_10 = arith.constant 0 : index
    %4 = vector.load %arg4[%c0_7, %c0_8, %c0_9, %c0_10] : memref<1x1x16x128xbf16, #tpu.memory_space<vmem>>, vector<1x1x16x128xbf16>
    %5 = vector.shape_cast %4 : vector<1x1x16x128xbf16> to vector<1x16x128xbf16>
    %6 = tpu.concatenate %1, %3, %5 in 0 : vector<1x16x128xbf16>, vector<8x16x128xbf16>, vector<1x16x128xbf16> -> vector<10x16x128xbf16>
    %7 = vector.shape_cast %6 : vector<10x16x128xbf16> to vector<160x128xbf16>
    %c0_11 = arith.constant 0 : index
    %c0_12 = arith.constant 0 : index
    %8 = vector.load %arg5[%c0_11, %c0_12] : memref<128x32xbf16, #tpu.memory_space<vmem>>, vector<128x32xbf16>
    %cst = arith.constant dense<0.000000e+00> : vector<160x32xf32>
    %9 = tpu.matmul %7, %8, %cst {dimension_numbers = #tpu.dot_dimension_numbers<[1], [0], [0], [1], [0, 0, 1, 1], [], []>} : vector<160x128xbf16>, vector<128x32xbf16>, vector<160x32xf32> -> vector<160x32xf32>
    %c0_13 = arith.constant 0 : index
    %c0_14 = arith.constant 0 : index
    %10 = vector.load %arg6[%c0_13, %c0_14] : memref<1x32xf32, #tpu.memory_space<vmem>>, vector<1x32xf32>
    %11 = vector.broadcast %10 : vector<1x32xf32> to vector<160x32xf32>
    %12 = arith.mulf %9, %11 : vector<160x32xf32>
    %c0_15 = arith.constant 0 : index
    %c0_16 = arith.constant 0 : index
    %13 = vector.load %arg7[%c0_15, %c0_16] : memref<1x32xf32, #tpu.memory_space<vmem>>, vector<1x32xf32>
    %14 = vector.broadcast %13 : vector<1x32xf32> to vector<160x32xf32>
    %15 = arith.addf %12, %14 : vector<160x32xf32>
    %cst_17 = arith.constant 0.000000e+00 : f32
    %16 = vector.broadcast %cst_17 : f32 to vector<160x32xf32>
    %17 = arith.maximumf %15, %16 : vector<160x32xf32>
    %18 = arith.truncf %17 : vector<160x32xf32> to vector<160x32xbf16>
    %19 = vector.shape_cast %18 : vector<160x32xbf16> to vector<10x16x32xbf16>
    %20 = tpu.iota {dimensions = array<i32: 0>} : vector<10x1x1xi32>
    %c0_i32 = arith.constant 0 : i32
    %21 = vector.broadcast %c0_i32 : i32 to vector<10x1x1xi32>
    %22 = arith.cmpi ne, %20, %21 : vector<10x1x1xi32>
    %c0_i32_18 = arith.constant 0 : i32
    %23 = arith.cmpi sgt, %arg1, %c0_i32_18 : i32
    %24 = vector.broadcast %23 : i1 to vector<10x1x1xi1>
    %25 = arith.ori %22, %24 : vector<10x1x1xi1>
    %c9_i32 = arith.constant 9 : i32
    %26 = vector.broadcast %c9_i32 : i32 to vector<10x1x1xi32>
    %27 = arith.cmpi ne, %20, %26 : vector<10x1x1xi32>
    %c1_i32 = arith.constant 1 : i32
    %28 = arith.cmpi slt, %arg1, %c1_i32 : i32
    %29 = vector.broadcast %28 : i1 to vector<10x1x1xi1>
    %30 = arith.ori %27, %29 : vector<10x1x1xi1>
    %31 = arith.andi %25, %30 : vector<10x1x1xi1>
    %32 = arith.extui %31 : vector<10x1x1xi1> to vector<10x1x1xi32>
    %33 = arith.sitofp %32 : vector<10x1x1xi32> to vector<10x1x1xf32>
    %34 = arith.truncf %33 : vector<10x1x1xf32> to vector<10x1x1xbf16>
    %35 = vector.broadcast %34 : vector<10x1x1xbf16> to vector<10x16x32xbf16>
    %36 = arith.mulf %19, %35 : vector<10x16x32xbf16>
    %cst_19 = arith.constant 0.000000e+00 : bf16
    %37 = vector.broadcast %cst_19 : bf16 to vector<10x1x32xbf16>
    %38 = tpu.concatenate %37, %36, %37 in 1 : vector<10x1x32xbf16>, vector<10x16x32xbf16>, vector<10x1x32xbf16> -> vector<10x18x32xbf16>
    %39 = vector.extract_strided_slice %38 {offsets = [0, 0, 0], sizes = [10, 16, 32], strides = [1, 1, 1]} : vector<10x18x32xbf16> to vector<10x16x32xbf16>
    %40 = vector.extract_strided_slice %38 {offsets = [0, 1, 0], sizes = [10, 16, 32], strides = [1, 1, 1]} : vector<10x18x32xbf16> to vector<10x16x32xbf16>
    %41 = vector.extract_strided_slice %38 {offsets = [0, 2, 0], sizes = [10, 16, 32], strides = [1, 1, 1]} : vector<10x18x32xbf16> to vector<10x16x32xbf16>
    %42 = tpu.concatenate %39, %40, %41 in 2 : vector<10x16x32xbf16>, vector<10x16x32xbf16>, vector<10x16x32xbf16> -> vector<10x16x96xbf16>
    %43 = vector.extract_strided_slice %42 {offsets = [0, 0, 0], sizes = [8, 16, 96], strides = [1, 1, 1]} : vector<10x16x96xbf16> to vector<8x16x96xbf16>
    %44 = vector.shape_cast %43 : vector<8x16x96xbf16> to vector<128x96xbf16>
    %c0_20 = arith.constant 0 : index
    %c0_21 = arith.constant 0 : index
    %c0_22 = arith.constant 0 : index
    %45 = vector.load %arg8[%c0_20, %c0_21, %c0_22] : memref<3x96x32xbf16, #tpu.memory_space<vmem>>, vector<1x96x32xbf16>
    %46 = vector.shape_cast %45 : vector<1x96x32xbf16> to vector<96x32xbf16>
    %cst_23 = arith.constant dense<0.000000e+00> : vector<128x32xf32>
    %47 = tpu.matmul %44, %46, %cst_23 {dimension_numbers = #tpu.dot_dimension_numbers<[1], [0], [0], [1], [0, 0, 1, 1], [], []>} : vector<128x96xbf16>, vector<96x32xbf16>, vector<128x32xf32> -> vector<128x32xf32>
    %48 = vector.extract_strided_slice %42 {offsets = [1, 0, 0], sizes = [8, 16, 96], strides = [1, 1, 1]} : vector<10x16x96xbf16> to vector<8x16x96xbf16>
    %49 = vector.shape_cast %48 : vector<8x16x96xbf16> to vector<128x96xbf16>
    %c1 = arith.constant 1 : index
    %c0_24 = arith.constant 0 : index
    %c0_25 = arith.constant 0 : index
    %50 = vector.load %arg8[%c1, %c0_24, %c0_25] : memref<3x96x32xbf16, #tpu.memory_space<vmem>>, vector<1x96x32xbf16>
    %51 = vector.shape_cast %50 : vector<1x96x32xbf16> to vector<96x32xbf16>
    %cst_26 = arith.constant dense<0.000000e+00> : vector<128x32xf32>
    %52 = tpu.matmul %49, %51, %cst_26 {dimension_numbers = #tpu.dot_dimension_numbers<[1], [0], [0], [1], [0, 0, 1, 1], [], []>} : vector<128x96xbf16>, vector<96x32xbf16>, vector<128x32xf32> -> vector<128x32xf32>
    %53 = arith.addf %47, %52 : vector<128x32xf32>
    %54 = vector.extract_strided_slice %42 {offsets = [2, 0, 0], sizes = [8, 16, 96], strides = [1, 1, 1]} : vector<10x16x96xbf16> to vector<8x16x96xbf16>
    %55 = vector.shape_cast %54 : vector<8x16x96xbf16> to vector<128x96xbf16>
    %c2 = arith.constant 2 : index
    %c0_27 = arith.constant 0 : index
    %c0_28 = arith.constant 0 : index
    %56 = vector.load %arg8[%c2, %c0_27, %c0_28] : memref<3x96x32xbf16, #tpu.memory_space<vmem>>, vector<1x96x32xbf16>
    %57 = vector.shape_cast %56 : vector<1x96x32xbf16> to vector<96x32xbf16>
    %cst_29 = arith.constant dense<0.000000e+00> : vector<128x32xf32>
    %58 = tpu.matmul %55, %57, %cst_29 {dimension_numbers = #tpu.dot_dimension_numbers<[1], [0], [0], [1], [0, 0, 1, 1], [], []>} : vector<128x96xbf16>, vector<96x32xbf16>, vector<128x32xf32> -> vector<128x32xf32>
    %59 = arith.addf %53, %58 : vector<128x32xf32>
    %c0_30 = arith.constant 0 : index
    %c0_31 = arith.constant 0 : index
    %60 = vector.load %arg9[%c0_30, %c0_31] : memref<1x32xf32, #tpu.memory_space<vmem>>, vector<1x32xf32>
    %61 = vector.broadcast %60 : vector<1x32xf32> to vector<128x32xf32>
    %62 = arith.mulf %59, %61 : vector<128x32xf32>
    %c0_32 = arith.constant 0 : index
    %c0_33 = arith.constant 0 : index
    %63 = vector.load %arg10[%c0_32, %c0_33] : memref<1x32xf32, #tpu.memory_space<vmem>>, vector<1x32xf32>
    %64 = vector.broadcast %63 : vector<1x32xf32> to vector<128x32xf32>
    %65 = arith.addf %62, %64 : vector<128x32xf32>
    %cst_34 = arith.constant 0.000000e+00 : f32
    %66 = vector.broadcast %cst_34 : f32 to vector<128x32xf32>
    %67 = arith.maximumf %65, %66 : vector<128x32xf32>
    %68 = arith.truncf %67 : vector<128x32xf32> to vector<128x32xbf16>
    %c0_35 = arith.constant 0 : index
    %c0_36 = arith.constant 0 : index
    %69 = vector.load %arg11[%c0_35, %c0_36] : memref<32x128xbf16, #tpu.memory_space<vmem>>, vector<32x128xbf16>
    %cst_37 = arith.constant dense<0.000000e+00> : vector<128x128xf32>
    %70 = tpu.matmul %68, %69, %cst_37 {dimension_numbers = #tpu.dot_dimension_numbers<[1], [0], [0], [1], [0, 0, 1, 1], [], []>} : vector<128x32xbf16>, vector<32x128xbf16>, vector<128x128xf32> -> vector<128x128xf32>
    %c0_38 = arith.constant 0 : index
    %c0_39 = arith.constant 0 : index
    %71 = vector.load %arg12[%c0_38, %c0_39] : memref<1x128xf32, #tpu.memory_space<vmem>>, vector<1x128xf32>
    %72 = vector.broadcast %71 : vector<1x128xf32> to vector<128x128xf32>
    %73 = arith.mulf %70, %72 : vector<128x128xf32>
    %c0_40 = arith.constant 0 : index
    %c0_41 = arith.constant 0 : index
    %74 = vector.load %arg13[%c0_40, %c0_41] : memref<1x128xf32, #tpu.memory_space<vmem>>, vector<1x128xf32>
    %75 = vector.broadcast %74 : vector<1x128xf32> to vector<128x128xf32>
    %76 = arith.addf %73, %75 : vector<128x128xf32>
    %c0_42 = arith.constant 0 : index
    %c0_43 = arith.constant 0 : index
    %c0_44 = arith.constant 0 : index
    %c0_45 = arith.constant 0 : index
    %77 = vector.load %arg3[%c0_42, %c0_43, %c0_44, %c0_45] : memref<1x8x16x128xbf16, #tpu.memory_space<vmem>>, vector<1x8x16x128xbf16>
    %78 = vector.shape_cast %77 : vector<1x8x16x128xbf16> to vector<8x16x128xbf16>
    %79 = vector.shape_cast %78 : vector<8x16x128xbf16> to vector<128x128xbf16>
    %80 = arith.extf %79 : vector<128x128xbf16> to vector<128x128xf32>
    %81 = arith.addf %76, %80 : vector<128x128xf32>
    %cst_46 = arith.constant 0.000000e+00 : f32
    %82 = vector.broadcast %cst_46 : f32 to vector<128x128xf32>
    %83 = arith.maximumf %81, %82 : vector<128x128xf32>
    %84 = vector.shape_cast %83 : vector<128x128xf32> to vector<8x16x128xf32>
    %85 = arith.truncf %84 : vector<8x16x128xf32> to vector<8x16x128xbf16>
    %c0_47 = arith.constant 0 : index
    %c0_48 = arith.constant 0 : index
    %c0_49 = arith.constant 0 : index
    %c0_50 = arith.constant 0 : index
    %86 = vector.load %arg14[%c0_47, %c0_48, %c0_49, %c0_50] : memref<1x8x16x128xbf16, #tpu.memory_space<vmem>>, vector<1x8x16x128xbf16>
    %87 = vector.shape_cast %86 : vector<1x8x16x128xbf16> to vector<8x16x128xbf16>
    %88 = vector.shape_cast %85 : vector<8x16x128xbf16> to vector<1x8x16x128xbf16>
    tpu.vector_store %arg14[%c0_47, %c0_48, %c0_49, %c0_50], %88 {strides = array<i32>} : memref<1x8x16x128xbf16, #tpu.memory_space<vmem>>, vector<1x8x16x128xbf16>,
    return
  }
  func.func @transform_0(%arg0: i32, %arg1: i32) -> (i32, i32, i32, i32) {
    %c8_i32 = arith.constant 8 : i32
    %0 = arith.muli %arg1, %c8_i32 : i32
    %c1_i32 = arith.constant 1 : i32
    %1 = arith.subi %0, %c1_i32 : i32
    %c0_i32 = arith.constant 0 : i32
    %2 = arith.maxsi %1, %c0_i32 : i32
    %c0_i32_0 = arith.constant 0 : i32
    %c0_i32_1 = arith.constant 0 : i32
    %c0_i32_2 = arith.constant 0 : i32
    return %arg0, %2, %c0_i32_0, %c0_i32_1 : i32, i32, i32, i32
  }
  func.func @transform_1(%arg0: i32, %arg1: i32) -> (i32, i32, i32, i32) {
    %c0_i32 = arith.constant 0 : i32
    %c0_i32_0 = arith.constant 0 : i32
    %c0_i32_1 = arith.constant 0 : i32
    return %arg0, %arg1, %c0_i32, %c0_i32_0 : i32, i32, i32, i32
  }
  func.func @transform_2(%arg0: i32, %arg1: i32) -> (i32, i32, i32, i32) {
    %c8_i32 = arith.constant 8 : i32
    %0 = arith.muli %arg1, %c8_i32 : i32
    %c8_i32_0 = arith.constant 8 : i32
    %1 = arith.addi %0, %c8_i32_0 : i32
    %c15_i32 = arith.constant 15 : i32
    %2 = arith.minsi %1, %c15_i32 : i32
    %c0_i32 = arith.constant 0 : i32
    %c0_i32_1 = arith.constant 0 : i32
    %c0_i32_2 = arith.constant 0 : i32
    return %arg0, %2, %c0_i32, %c0_i32_1 : i32, i32, i32, i32
  }
  func.func @transform_3(%arg0: i32, %arg1: i32) -> (i32, i32) {
    %c0_i32 = arith.constant 0 : i32
    %c0_i32_0 = arith.constant 0 : i32
    %c0_i32_1 = arith.constant 0 : i32
    return %c0_i32, %c0_i32_0 : i32, i32
  }
  func.func @transform_4(%arg0: i32, %arg1: i32) -> (i32, i32) {
    %c0_i32 = arith.constant 0 : i32
    %c0_i32_0 = arith.constant 0 : i32
    %c0_i32_1 = arith.constant 0 : i32
    return %c0_i32, %c0_i32_0 : i32, i32
  }
  func.func @transform_5(%arg0: i32, %arg1: i32) -> (i32, i32) {
    %c0_i32 = arith.constant 0 : i32
    %c0_i32_0 = arith.constant 0 : i32
    %c0_i32_1 = arith.constant 0 : i32
    return %c0_i32, %c0_i32_0 : i32, i32
  }
  func.func @transform_6(%arg0: i32, %arg1: i32) -> (i32, i32, i32) {
    %c0_i32 = arith.constant 0 : i32
    %c0_i32_0 = arith.constant 0 : i32
    %c0_i32_1 = arith.constant 0 : i32
    %c0_i32_2 = arith.constant 0 : i32
    return %c0_i32, %c0_i32_0, %c0_i32_1 : i32, i32, i32
  }
  func.func @transform_7(%arg0: i32, %arg1: i32) -> (i32, i32) {
    %c0_i32 = arith.constant 0 : i32
    %c0_i32_0 = arith.constant 0 : i32
    %c0_i32_1 = arith.constant 0 : i32
    return %c0_i32, %c0_i32_0 : i32, i32
  }
  func.func @transform_8(%arg0: i32, %arg1: i32) -> (i32, i32) {
    %c0_i32 = arith.constant 0 : i32
    %c0_i32_0 = arith.constant 0 : i32
    %c0_i32_1 = arith.constant 0 : i32
    return %c0_i32, %c0_i32_0 : i32, i32
  }
  func.func @transform_9(%arg0: i32, %arg1: i32) -> (i32, i32) {
    %c0_i32 = arith.constant 0 : i32
    %c0_i32_0 = arith.constant 0 : i32
    %c0_i32_1 = arith.constant 0 : i32
    return %c0_i32, %c0_i32_0 : i32, i32
  }
  func.func @transform_10(%arg0: i32, %arg1: i32) -> (i32, i32) {
    %c0_i32 = arith.constant 0 : i32
    %c0_i32_0 = arith.constant 0 : i32
    %c0_i32_1 = arith.constant 0 : i32
    return %c0_i32, %c0_i32_0 : i32, i32
  }
  func.func @transform_11(%arg0: i32, %arg1: i32) -> (i32, i32) {
    %c0_i32 = arith.constant 0 : i32
    %c0_i32_0 = arith.constant 0 : i32
    %c0_i32_1 = arith.constant 0 : i32
    return %c0_i32, %c0_i32_0 : i32, i32
  }
  func.func @transform_12(%arg0: i32, %arg1: i32) -> (i32, i32, i32, i32) {
    %c0_i32 = arith.constant 0 : i32
    %c0_i32_0 = arith.constant 0 : i32
    %c0_i32_1 = arith.constant 0 : i32
    return %arg0, %arg1, %c0_i32, %c0_i32_0 : i32, i32, i32, i32
  }
}

</mosaic_0001>

<llo_original>
// kernel: bottleneck_forward.1
$region0: #{bottleneck_forward.1}
  #allocation0 [shape = 'u32[]', space=smem, size = 0x4, offset = 0x4, fixed_abs, tag = 'smem constant byte address 0x4 - core index']
  #allocation1 [shape = 'u32[144,128]{1,0:T(1,128)}', space=vmem, size = 0x12000, scoped, tag = 'internal scratch']
  %s0 = inlined_call_operand.vmem [shape: bf16[2,16,16,128], index: 0, kind: input, shape index: {}, may-alias: {0,1,2}]
  %s1 = inlined_call_operand.vmem [shape: bf16[2,16,16,128], index: 1, kind: input, shape index: {}, may-alias: {0,1,2}]
  %s2 = inlined_call_operand.vmem [shape: bf16[2,16,16,128], index: 2, kind: input, shape index: {}, may-alias: {0,1,2}]
  %s3 = inlined_call_operand.vmem [shape: bf16[128,32], index: 3, kind: input, shape index: {}]
  %s4 = inlined_call_operand.vmem [shape: f32[1,32], index: 4, kind: input, shape index: {}]
  %s5 = inlined_call_operand.vmem [shape: f32[1,32], index: 5, kind: input, shape index: {}]
  %s6 = inlined_call_operand.vmem [shape: bf16[3,96,32], index: 6, kind: input, shape index: {}]
  %s7 = inlined_call_operand.vmem [shape: f32[1,32], index: 7, kind: input, shape index: {}]
  %s8 = inlined_call_operand.vmem [shape: f32[1,32], index: 8, kind: input, shape index: {}]
  %s9 = inlined_call_operand.vmem [shape: bf16[32,128], index: 9, kind: input, shape index: {}]
  %s10 = inlined_call_operand.vmem [shape: f32[1,128], index: 10, kind: input, shape index: {}]
  %s11 = inlined_call_operand.vmem [shape: f32[1,128], index: 11, kind: input, shape index: {}]
  %s12 = inlined_call_operand.hbm [shape: bf16[2,16,16,128], index: 12, kind: output, shape index: {}]
  %s13 = sld [smem:[#allocation0]]
  $region81: #{bottleneck_forward.1} parent=0
    _
  %s15 = ssub.s32 1, %s13
  %s16 = scalar_select 0, %s15, %s13
  $region1: #{bottleneck_forward.1} parent=0
    #allocation2 [shape = 'u8[65536]{0}', space=vmem, size = 0x10000, scoped, tag = 'output window, operand 0']
    #allocation3 [shape = 's32[2]{0}', space=sflag, size = 0x8, scoped, tag = 'scoped memory for bottleneck_forward.1']
    %17 = vsyncpa [#allocation3], 0
    %s18 = scalar_lea.sflag [#allocation3], 1
    %19 = vsyncpa %s18, 0
    loop: start=0, step=1, limit=6
    $region2: #{bottleneck_forward.1} parent=1 // loop_pre_header
      _
    $region3: #{bottleneck_forward.1} parent=1 // loop_header
      %s21 = sphi 0, %s25
      %p22 = scmp.ge.s32.totalorder %s21, 6
      %s28 = sphi 0, %s40
      %s29 = sphi 0, %s36
      %s30 = sphi 0, %s28
      %s31 = sphi 0, %s29
      %s32 = sphi 0, %s30
      %s33 = sphi 0, %s31
      %s53 = sphi 0, %s55
      %s56 = sphi 0, %s53
      %s57 = sphi 0, %s56
      %s73 = sphi 0, %s57
      %s81 = sphi 0, %s83
      %s84 = sphi 0, %s81
      %s85 = sphi 0, %s84
      %s101 = sphi 0, %s85
      %s117 = sphi 0, %s119
      %s120 = sphi 0, %s117
      %s121 = sphi 0, %s120
      %s137 = sphi 0, %s121
      %s141 = sphi 0, %s141
      %s143 = sphi 0, %s141
      %s144 = sphi 0, %s143
      %s158 = sphi 0, %s144
      %s162 = sphi 0, %s162
      %s164 = sphi 0, %s162
      %s165 = sphi 0, %s164
      %s179 = sphi 0, %s165
      %s183 = sphi 0, %s183
      %s185 = sphi 0, %s183
      %s186 = sphi 0, %s185
      %s200 = sphi 0, %s186
      %s204 = sphi 0, %s204
      %s206 = sphi 0, %s204
      %s207 = sphi 0, %s206
      %s221 = sphi 0, %s207
      %s225 = sphi 0, %s225
      %s227 = sphi 0, %s225
      %s228 = sphi 0, %s227
      %s242 = sphi 0, %s228
      %s246 = sphi 0, %s246
      %s248 = sphi 0, %s246
      %s249 = sphi 0, %s248
      %s263 = sphi 0, %s249
      %s267 = sphi 0, %s267
      %s269 = sphi 0, %s267
      %s270 = sphi 0, %s269
      %s284 = sphi 0, %s270
      %s288 = sphi 0, %s288
      %s290 = sphi 0, %s288
      %s291 = sphi 0, %s290
      %s305 = sphi 0, %s291
      %s309 = sphi 0, %s309
      %s311 = sphi 0, %s309
      %s312 = sphi 0, %s311
      %s326 = sphi 0, %s312
      %s334 = sphi 0, %s336
      %s337 = sphi 0, %s334
      %s338 = sphi 0, %s337
      %s354 = sphi 0, %s338
    $region4: #{bottleneck_forward.1} parent=1 // loop_header_branch
      %24 = sbr.rel (%p22) target = $region8
    $region5: #{bottleneck_forward.1} parent=1 // loop_body
      %s26 = ssub.s32 %s21, 1
      %s27 = ssub.s32 %s21, 2
      %s34 = sadd.s32 1, %s29
      %p35 = scmp.ge.s32.totalorder %s34, 2
      %s36 = scalar_select %p35, 0, %s34
      %s37 = sadd.s32 1, %s28
      %s38 = scalar_select %p35, %s37, %s28
      %p39 = scmp.ge.s32.totalorder %s38, 2
      %s40 = scalar_select %p39, 0, %s38
      %s41 = smul.u32 %s29, 8
      %s42 = ssub.s32 %s41, 1
      %p43 = scmp.gt.s32.totalorder %s42, 0
      %s44 = scalar_select %p43, %s42, 0
      %s45 = smul.u32 %s36, 8
      %s46 = ssub.s32 %s45, 1
      %p47 = scmp.gt.s32.totalorder %s46, 0
      %s48 = scalar_select %p47, %s46, 0
      %s49 = ssub.s32 %s28, %s40
      %s50 = ssub.s32 %s44, %s48
      %s51 = sor.u32 %s49, %s50
      %p52 = scmp.eq.s32.totalorder %s51, 0
      %s54 = sadd.s32 %s53, 1
      %s55 = scalar_select %p52, %s53, %s54
      %p58 = pneg %p52
      %p59 = scmp.eq.s32.totalorder %s21, 3
      %p60 = por %p58, %p59
      %p61 = scmp.ne.s32.totalorder %s53, %s56
      %p62 = scmp.eq.s32.totalorder %s21, 0
      %p63 = por %p61, %p62
      %p64 = scmp.ne.s32.totalorder %s53, %s56
      %p65 = scmp.eq.s32.totalorder %s26, 3
      %p66 = por %p64, %p65
      %p67 = scmp.ne.s32.totalorder %s56, %s57
      %p68 = scmp.eq.s32.totalorder %s26, 0
      %p69 = por %p67, %p68
      %p70 = scmp.ne.s32.totalorder %s56, %s57
      %p71 = scmp.eq.s32.totalorder %s27, 3
      %p72 = por %p70, %p71
      %p74 = scmp.ne.s32.totalorder %s57, %s73
      %p75 = scmp.eq.s32.totalorder %s27, 0
      %p76 = por %p74, %p75
      %s77 = ssub.s32 %s28, %s40
      %s78 = ssub.s32 %s29, %s36
      %s79 = sor.u32 %s77, %s78
      %p80 = scmp.eq.s32.totalorder %s79, 0
      %s82 = sadd.s32 %s81, 1
      %s83 = scalar_select %p80, %s81, %s82
      %p86 = pneg %p80
      %p87 = scmp.eq.s32.totalorder %s21, 3
      %p88 = por %p86, %p87
      %p89 = scmp.ne.s32.totalorder %s81, %s84
      %p90 = scmp.eq.s32.totalorder %s21, 0
      %p91 = por %p89, %p90
      %p92 = scmp.ne.s32.totalorder %s81, %s84
      %p93 = scmp.eq.s32.totalorder %s26, 3
      %p94 = por %p92, %p93
      %p95 = scmp.ne.s32.totalorder %s84, %s85
      %p96 = scmp.eq.s32.totalorder %s26, 0
      %p97 = por %p95, %p96
      %p98 = scmp.ne.s32.totalorder %s84, %s85
      %p99 = scmp.eq.s32.totalorder %s27, 3
      %p100 = por %p98, %p99
      %p102 = scmp.ne.s32.totalorder %s85, %s101
      %p103 = scmp.eq.s32.totalorder %s27, 0
      %p104 = por %p102, %p103
      %s105 = smul.u32 %s29, 8
      %s106 = sadd.s32 %s105, 8
      %p107 = scmp.lt.s32.totalorder %s106, 15
      %s108 = scalar_select %p107, %s106, 15
      %s109 = smul.u32 %s36, 8
      %s110 = sadd.s32 %s109, 8
      %p111 = scmp.lt.s32.totalorder %s110, 15
      %s112 = scalar_select %p111, %s110, 15
      %s113 = ssub.s32 %s28, %s40
      %s114 = ssub.s32 %s108, %s112
      %s115 = sor.u32 %s113, %s114
      %p116 = scmp.eq.s32.totalorder %s115, 0
      %s118 = sadd.s32 %s117, 1
      %s119 = scalar_select %p116, %s117, %s118
      %p122 = pneg %p116
      %p123 = scmp.eq.s32.totalorder %s21, 3
      %p124 = por %p122, %p123
      %p125 = scmp.ne.s32.totalorder %s117, %s120
      %p126 = scmp.eq.s32.totalorder %s21, 0
      %p127 = por %p125, %p126
      %p128 = scmp.ne.s32.totalorder %s117, %s120
      %p129 = scmp.eq.s32.totalorder %s26, 3
      %p130 = por %p128, %p129
      %p131 = scmp.ne.s32.totalorder %s120, %s121
      %p132 = scmp.eq.s32.totalorder %s26, 0
      %p133 = por %p131, %p132
      %p134 = scmp.ne.s32.totalorder %s120, %s121
      %p135 = scmp.eq.s32.totalorder %s27, 3
      %p136 = por %p134, %p135
      %p138 = scmp.ne.s32.totalorder %s121, %s137
      %p139 = scmp.eq.s32.totalorder %s27, 0
      %p140 = por %p138, %p139
      %s142 = sadd.s32 %s141, 1
      %p145 = scmp.eq.s32.totalorder %s21, 3
      %p146 = scmp.ne.s32.totalorder %s141, %s143
      %p147 = scmp.eq.s32.totalorder %s21, 0
      %p148 = por %p146, %p147
      %p149 = scmp.ne.s32.totalorder %s141, %s143
      %p150 = scmp.eq.s32.totalorder %s26, 3
      %p151 = por %p149, %p150
      %p152 = scmp.ne.s32.totalorder %s143, %s144
      %p153 = scmp.eq.s32.totalorder %s26, 0
      %p154 = por %p152, %p153
      %p155 = scmp.ne.s32.totalorder %s143, %s144
      %p156 = scmp.eq.s32.totalorder %s27, 3
      %p157 = por %p155, %p156
      %p159 = scmp.ne.s32.totalorder %s144, %s158
      %p160 = scmp.eq.s32.totalorder %s27, 0
      %p161 = por %p159, %p160
      %s163 = sadd.s32 %s162, 1
      %p166 = scmp.eq.s32.totalorder %s21, 3
      %p167 = scmp.ne.s32.totalorder %s162, %s164
      %p168 = scmp.eq.s32.totalorder %s21, 0
      %p169 = por %p167, %p168
      %p170 = scmp.ne.s32.totalorder %s162, %s164
      %p171 = scmp.eq.s32.totalorder %s26, 3
      %p172 = por %p170, %p171
      %p173 = scmp.ne.s32.totalorder %s164, %s165
      %p174 = scmp.eq.s32.totalorder %s26, 0
      %p175 = por %p173, %p174
      %p176 = scmp.ne.s32.totalorder %s164, %s165
      %p177 = scmp.eq.s32.totalorder %s27, 3
      %p178 = por %p176, %p177
      %p180 = scmp.ne.s32.totalorder %s165, %s179
      %p181 = scmp.eq.s32.totalorder %s27, 0
      %p182 = por %p180, %p181
      %s184 = sadd.s32 %s183, 1
      %p187 = scmp.eq.s32.totalorder %s21, 3
      %p188 = scmp.ne.s32.totalorder %s183, %s185
      %p189 = scmp.eq.s32.totalorder %s21, 0
      %p190 = por %p188, %p189
      %p191 = scmp.ne.s32.totalorder %s183, %s185
      %p192 = scmp.eq.s32.totalorder %s26, 3
      %p193 = por %p191, %p192
      %p194 = scmp.ne.s32.totalorder %s185, %s186
      %p195 = scmp.eq.s32.totalorder %s26, 0
      %p196 = por %p194, %p195
      %p197 = scmp.ne.s32.totalorder %s185, %s186
      %p198 = scmp.eq.s32.totalorder %s27, 3
      %p199 = por %p197, %p198
      %p201 = scmp.ne.s32.totalorder %s186, %s200
      %p202 = scmp.eq.s32.totalorder %s27, 0
      %p203 = por %p201, %p202
      %s205 = sadd.s32 %s204, 1
      %p208 = scmp.eq.s32.totalorder %s21, 3
      %p209 = scmp.ne.s32.totalorder %s204, %s206
      %p210 = scmp.eq.s32.totalorder %s21, 0
      %p211 = por %p209, %p210
      %p212 = scmp.ne.s32.totalorder %s204, %s206
      %p213 = scmp.eq.s32.totalorder %s26, 3
      %p214 = por %p212, %p213
      %p215 = scmp.ne.s32.totalorder %s206, %s207
      %p216 = scmp.eq.s32.totalorder %s26, 0
      %p217 = por %p215, %p216
      %p218 = scmp.ne.s32.totalorder %s206, %s207
      %p219 = scmp.eq.s32.totalorder %s27, 3
      %p220 = por %p218, %p219
      %p222 = scmp.ne.s32.totalorder %s207, %s221
      %p223 = scmp.eq.s32.totalorder %s27, 0
      %p224 = por %p222, %p223
      %s226 = sadd.s32 %s225, 1
      %p229 = scmp.eq.s32.totalorder %s21, 3
      %p230 = scmp.ne.s32.totalorder %s225, %s227
      %p231 = scmp.eq.s32.totalorder %s21, 0
      %p232 = por %p230, %p231
      %p233 = scmp.ne.s32.totalorder %s225, %s227
      %p234 = scmp.eq.s32.totalorder %s26, 3
      %p235 = por %p233, %p234
      %p236 = scmp.ne.s32.totalorder %s227, %s228
      %p237 = scmp.eq.s32.totalorder %s26, 0
      %p238 = por %p236, %p237
      %p239 = scmp.ne.s32.totalorder %s227, %s228
      %p240 = scmp.eq.s32.totalorder %s27, 3
      %p241 = por %p239, %p240
      %p243 = scmp.ne.s32.totalorder %s228, %s242
      %p244 = scmp.eq.s32.totalorder %s27, 0
      %p245 = por %p243, %p244
      %s247 = sadd.s32 %s246, 1
      %p250 = scmp.eq.s32.totalorder %s21, 3
      %p251 = scmp.ne.s32.totalorder %s246, %s248
      %p252 = scmp.eq.s32.totalorder %s21, 0
      %p253 = por %p251, %p252
      %p254 = scmp.ne.s32.totalorder %s246, %s248
      %p255 = scmp.eq.s32.totalorder %s26, 3
      %p256 = por %p254, %p255
      %p257 = scmp.ne.s32.totalorder %s248, %s249
      %p258 = scmp.eq.s32.totalorder %s26, 0
      %p259 = por %p257, %p258
      %p260 = scmp.ne.s32.totalorder %s248, %s249
      %p261 = scmp.eq.s32.totalorder %s27, 3
      %p262 = por %p260, %p261
      %p264 = scmp.ne.s32.totalorder %s249, %s263
      %p265 = scmp.eq.s32.totalorder %s27, 0
      %p266 = por %p264, %p265
      %s268 = sadd.s32 %s267, 1
      %p271 = scmp.eq.s32.totalorder %s21, 3
      %p272 = scmp.ne.s32.totalorder %s267, %s269
      %p273 = scmp.eq.s32.totalorder %s21, 0
      %p274 = por %p272, %p273
      %p275 = scmp.ne.s32.totalorder %s267, %s269
      %p276 = scmp.eq.s32.totalorder %s26, 3
      %p277 = por %p275, %p276
      %p278 = scmp.ne.s32.totalorder %s269, %s270
      %p279 = scmp.eq.s32.totalorder %s26, 0
      %p280 = por %p278, %p279
      %p281 = scmp.ne.s32.totalorder %s269, %s270
      %p282 = scmp.eq.s32.totalorder %s27, 3
      %p283 = por %p281, %p282
      %p285 = scmp.ne.s32.totalorder %s270, %s284
      %p286 = scmp.eq.s32.totalorder %s27, 0
      %p287 = por %p285, %p286
      %s289 = sadd.s32 %s288, 1
      %p292 = scmp.eq.s32.totalorder %s21, 3
      %p293 = scmp.ne.s32.totalorder %s288, %s290
      %p294 = scmp.eq.s32.totalorder %s21, 0
      %p295 = por %p293, %p294
      %p296 = scmp.ne.s32.totalorder %s288, %s290
      %p297 = scmp.eq.s32.totalorder %s26, 3
      %p298 = por %p296, %p297
      %p299 = scmp.ne.s32.totalorder %s290, %s291
      %p300 = scmp.eq.s32.totalorder %s26, 0
      %p301 = por %p299, %p300
      %p302 = scmp.ne.s32.totalorder %s290, %s291
      %p303 = scmp.eq.s32.totalorder %s27, 3
      %p304 = por %p302, %p303
      %p306 = scmp.ne.s32.totalorder %s291, %s305
      %p307 = scmp.eq.s32.totalorder %s27, 0
      %p308 = por %p306, %p307
      %s310 = sadd.s32 %s309, 1
      %p313 = scmp.eq.s32.totalorder %s21, 3
      %p314 = scmp.ne.s32.totalorder %s309, %s311
      %p315 = scmp.eq.s32.totalorder %s21, 0
      %p316 = por %p314, %p315
      %p317 = scmp.ne.s32.totalorder %s309, %s311
      %p318 = scmp.eq.s32.totalorder %s26, 3
      %p319 = por %p317, %p318
      %p320 = scmp.ne.s32.totalorder %s311, %s312
      %p321 = scmp.eq.s32.totalorder %s26, 0
      %p322 = por %p320, %p321
      %p323 = scmp.ne.s32.totalorder %s311, %s312
      %p324 = scmp.eq.s32.totalorder %s27, 3
      %p325 = por %p323, %p324
      %p327 = scmp.ne.s32.totalorder %s312, %s326
      %p328 = scmp.eq.s32.totalorder %s27, 0
      %p329 = por %p327, %p328
      %s330 = ssub.s32 %s28, %s40
      %s331 = ssub.s32 %s29, %s36
      %s332 = sor.u32 %s330, %s331
      %p333 = scmp.eq.s32.totalorder %s332, 0
      %s335 = sadd.s32 %s334, 1
      %s336 = scalar_select %p333, %s334, %s335
      %p339 = pneg %p333
      %p340 = scmp.eq.s32.totalorder %s21, 3
      %p341 = por %p339, %p340
      %p342 = scmp.ne.s32.totalorder %s334, %s337
      %p343 = scmp.eq.s32.totalorder %s21, 0
      %p344 = por %p342, %p343
      %p345 = scmp.ne.s32.totalorder %s334, %s337
      %p346 = scmp.eq.s32.totalorder %s26, 3
      %p347 = por %p345, %p346
      %p348 = scmp.ne.s32.totalorder %s337, %s338
      %p349 = scmp.eq.s32.totalorder %s26, 0
      %p350 = por %p348, %p349
      %p351 = scmp.ne.s32.totalorder %s337, %s338
      %p352 = scmp.eq.s32.totalorder %s27, 3
      %p353 = por %p351, %p352
      %p355 = scmp.ne.s32.totalorder %s338, %s354
      %p356 = scmp.eq.s32.totalorder %s27, 0
      %p357 = por %p355, %p356
      %p358 = scmp.le.s32.totalorder 1, %s21
      %p359 = scmp.lt.s32.totalorder %s21, 5
      %p360 = pnand %p358, %p359
      %p361 = pneg %p360
      // Predicated region
      $region9: #{bottleneck_forward.1} parent=5 // pred_check
        _
      $region10: #{bottleneck_forward.1} parent=5 // pred_check_branch
        %363 = sbr.rel (%p360) target = $region12
      $region11: #{bottleneck_forward.1} parent=5 // pred_region
        %s364 = ssub.s32 %s21, 1
        // Predicated region
        $region13: #{bottleneck_forward.1} parent=11 // pred_check
          %p365 = pneg %p154
        $region14: #{bottleneck_forward.1} parent=11 // pred_check_branch
          %367 = sbr.rel (%p365) target = $region16
        $region15: #{bottleneck_forward.1} parent=11 // pred_region
          _
        $region16: #{bottleneck_forward.1} parent=11 // pred_fallthru
          _
        // Predicated region
        $region17: #{bottleneck_forward.1} parent=11 // pred_check
          %p368 = pneg %p175
        $region18: #{bottleneck_forward.1} parent=11 // pred_check_branch
          %370 = sbr.rel (%p368) target = $region20
        $region19: #{bottleneck_forward.1} parent=11 // pred_region
          _
        $region20: #{bottleneck_forward.1} parent=11 // pred_fallthru
          _
        // Predicated region
        $region21: #{bottleneck_forward.1} parent=11 // pred_check
          %p371 = pneg %p196
        $region22: #{bottleneck_forward.1} parent=11 // pred_check_branch
          %373 = sbr.rel (%p371) target = $region24
        $region23: #{bottleneck_forward.1} parent=11 // pred_region
          _
        $region24: #{bottleneck_forward.1} parent=11 // pred_fallthru
          _
        // Predicated region
        $region25: #{bottleneck_forward.1} parent=11 // pred_check
          %p374 = pneg %p217
        $region26: #{bottleneck_forward.1} parent=11 // pred_check_branch
          %376 = sbr.rel (%p374) target = $region28
        $region27: #{bottleneck_forward.1} parent=11 // pred_region
          _
        $region28: #{bottleneck_forward.1} parent=11 // pred_fallthru
          _
        // Predicated region
        $region29: #{bottleneck_forward.1} parent=11 // pred_check
          %p377 = pneg %p238
        $region30: #{bottleneck_forward.1} parent=11 // pred_check_branch
          %379 = sbr.rel (%p377) target = $region32
        $region31: #{bottleneck_forward.1} parent=11 // pred_region
          _
        $region32: #{bottleneck_forward.1} parent=11 // pred_fallthru
          _
        // Predicated region
        $region33: #{bottleneck_forward.1} parent=11 // pred_check
          %p380 = pneg %p259
        $region34: #{bottleneck_forward.1} parent=11 // pred_check_branch
          %382 = sbr.rel (%p380) target = $region36
        $region35: #{bottleneck_forward.1} parent=11 // pred_region
          _
        $region36: #{bottleneck_forward.1} parent=11 // pred_fallthru
          _
        // Predicated region
        $region37: #{bottleneck_forward.1} parent=11 // pred_check
          %p383 = pneg %p280
        $region38: #{bottleneck_forward.1} parent=11 // pred_check_branch
          %385 = sbr.rel (%p383) target = $region40
        $region39: #{bottleneck_forward.1} parent=11 // pred_region
          _
        $region40: #{bottleneck_forward.1} parent=11 // pred_fallthru
          _
        // Predicated region
        $region41: #{bottleneck_forward.1} parent=11 // pred_check
          %p386 = pneg %p301
        $region42: #{bottleneck_forward.1} parent=11 // pred_check_branch
          %388 = sbr.rel (%p386) target = $region44
        $region43: #{bottleneck_forward.1} parent=11 // pred_region
          _
        $region44: #{bottleneck_forward.1} parent=11 // pred_fallthru
          _
        // Predicated region
        $region45: #{bottleneck_forward.1} parent=11 // pred_check
          %p389 = pneg %p322
        $region46: #{bottleneck_forward.1} parent=11 // pred_check_branch
          %391 = sbr.rel (%p389) target = $region48
        $region47: #{bottleneck_forward.1} parent=11 // pred_region
          _
        $region48: #{bottleneck_forward.1} parent=11 // pred_fallthru
          _
      $region12: #{bottleneck_forward.1} parent=5 // pred_fallthru
        _
      %p392 = scmp.lt.s32.totalorder %s21, 4
      // Predicated region
      $region49: #{bottleneck_forward.1} parent=5 // pred_check
        %p393 = pneg %p392
      $region50: #{bottleneck_forward.1} parent=5 // pred_check_branch
        %395 = sbr.rel (%p393) target = $region52
      $region51: #{bottleneck_forward.1} parent=5 // pred_region
        // Predicated region
        $region53: #{bottleneck_forward.1} parent=51 // pred_check
          %p396 = pneg %p63
        $region54: #{bottleneck_forward.1} parent=51 // pred_check_branch
          %398 = sbr.rel (%p396) target = $region56
        $region55: #{bottleneck_forward.1} parent=51 // pred_region
          %s399 = smul.u32 %s29, 8
          %s400 = ssub.s32 %s399, 1
          %p401 = scmp.gt.s32.totalorder %s400, 0
          %s402 = scalar_select %p401, %s400, 0
          %p403 = scmp.lt.s32.totalorder %s28, 1
          %s404 = scalar_select %p403, %s28, 1
          %p405 = scmp.lt.s32.totalorder %s402, 15
          %s406 = scalar_select %p405, %s402, 15
          %s407 = smul.addr %s406, 2
          %s408 = smul.addr %s404, 32
          %s409 = sadd.s32 %s407, %s408
          %s410 = smul.addr %s409, 4
          %s411 = scalar_lea.vmem %s0, %s410
          %s412 = smul.u32 %s29, 8
          %s413 = ssub.s32 %s412, 1
          %p414 = scmp.gt.s32.totalorder %s413, 0
          %s415 = scalar_select %p414, %s413, 0
        $region56: #{bottleneck_forward.1} parent=51 // pred_fallthru
          _
        // Predicated region
        $region57: #{bottleneck_forward.1} parent=51 // pred_check
          %p416 = pneg %p91
        $region58: #{bottleneck_forward.1} parent=51 // pred_check_branch
          %418 = sbr.rel (%p416) target = $region60
        $region59: #{bottleneck_forward.1} parent=51 // pred_region
          %s419 = smul.u32 8, %s29
          %p420 = scmp.lt.s32.totalorder %s28, 1
          %s421 = scalar_select %p420, %s28, 1
          %p422 = scmp.lt.s32.totalorder %s419, 15
          %s423 = scalar_select %p422, %s419, 15
          %s424 = smul.addr %s423, 2
          %s425 = smul.addr %s421, 32
          %s426 = sadd.s32 %s424, %s425
          %s427 = smul.addr %s426, 4
          %s428 = scalar_lea.vmem %s1, %s427
          %s429 = smul.u32 8, %s29
        $region60: #{bottleneck_forward.1} parent=51 // pred_fallthru
          _
        // Predicated region
        $region61: #{bottleneck_forward.1} parent=51 // pred_check
          %p430 = pneg %p127
        $region62: #{bottleneck_forward.1} parent=51 // pred_check_branch
          %432 = sbr.rel (%p430) target = $region64
        $region63: #{bottleneck_forward.1} parent=51 // pred_region
          %s433 = smul.u32 %s29, 8
          %s434 = sadd.s32 %s433, 8
          %p435 = scmp.lt.s32.totalorder %s434, 15
          %s436 = scalar_select %p435, %s434, 15
          %p437 = scmp.lt.s32.totalorder %s28, 1
          %s438 = scalar_select %p437, %s28, 1
          %p439 = scmp.lt.s32.totalorder %s436, 15
          %s440 = scalar_select %p439, %s436, 15
          %s441 = smul.addr %s440, 2
          %s442 = smul.addr %s438, 32
          %s443 = sadd.s32 %s441, %s442
          %s444 = smul.addr %s443, 4
          %s445 = scalar_lea.vmem %s2, %s444
          %s446 = smul.u32 %s29, 8
          %s447 = sadd.s32 %s446, 8
          %p448 = scmp.lt.s32.totalorder %s447, 15
          %s449 = scalar_select %p448, %s447, 15
        $region64: #{bottleneck_forward.1} parent=51 // pred_fallthru
          _
      $region52: #{bottleneck_forward.1} parent=5 // pred_fallthru
        _
      %p450 = scmp.le.s32.totalorder 1, %s21
      %p451 = scmp.lt.s32.totalorder %s21, 5
      %p452 = pnand %p450, %p451
      %p453 = pneg %p452
      // Predicated region
      $region65: #{bottleneck_forward.1} parent=5 // pred_check
        _
      $region66: #{bottleneck_forward.1} parent=5 // pred_check_branch
        %455 = sbr.rel (%p452) target = $region68
      $region67: #{bottleneck_forward.1} parent=5 // pred_region
        %s456 = ssub.s32 %s21, 1
        %s457 = smul.u32 %s31, 8
        %s458 = ssub.s32 %s457, 1
        %p459 = scmp.gt.s32.totalorder %s458, 0
        %s460 = scalar_select %p459, %s458, 0
        %p461 = scmp.lt.s32.totalorder %s30, 1
        %s462 = scalar_select %p461, %s30, 1
        %p463 = scmp.lt.s32.totalorder %s460, 15
        %s464 = scalar_select %p463, %s460, 15
        %s465 = smul.addr %s464, 2
        %s466 = smul.addr %s462, 32
        %s467 = sadd.s32 %s465, %s466
        %s468 = smul.addr %s467, 4
        %s469 = scalar_lea.vmem %s0, %s468
        %p470 = pneg %p69
        %p471 = pneg %p66
        %s472 = smul.u32 8, %s31
        %p473 = scmp.lt.s32.totalorder %s30, 1
        %s474 = scalar_select %p473, %s30, 1
        %p475 = scmp.lt.s32.totalorder %s472, 15
        %s476 = scalar_select %p475, %s472, 15
        %s477 = smul.addr %s476, 2
        %s478 = smul.addr %s474, 32
        %s479 = sadd.s32 %s477, %s478
        %s480 = smul.addr %s479, 4
        %s481 = scalar_lea.vmem %s1, %s480
        %p482 = pneg %p97
        %p483 = pneg %p94
        %s484 = smul.u32 %s31, 8
        %s485 = sadd.s32 %s484, 8
        %p486 = scmp.lt.s32.totalorder %s485, 15
        %s487 = scalar_select %p486, %s485, 15
        %p488 = scmp.lt.s32.totalorder %s30, 1
        %s489 = scalar_select %p488, %s30, 1
        %p490 = scmp.lt.s32.totalorder %s487, 15
        %s491 = scalar_select %p490, %s487, 15
        %s492 = smul.addr %s491, 2
        %s493 = smul.addr %s489, 32
        %s494 = sadd.s32 %s492, %s493
        %s495 = smul.addr %s494, 4
        %s496 = scalar_lea.vmem %s2, %s495
        %p497 = pneg %p133
        %p498 = pneg %p130
        %p499 = pneg %p154
        %p500 = pneg %p151
        %p501 = pneg %p175
        %p502 = pneg %p172
        %p503 = pneg %p196
        %p504 = pneg %p193
        %p505 = pneg %p217
        %p506 = pneg %p214
        %p507 = pneg %p238
        %p508 = pneg %p235
        %p509 = pneg %p259
        %p510 = pneg %p256
        %p511 = pneg %p280
        %p512 = pneg %p277
        %p513 = pneg %p301
        %p514 = pneg %p298
        %p515 = pneg %p322
        %p516 = pneg %p319
        %p517 = pneg %p350
        %p518 = pneg %p347
        %s519 = sand.u32 %s337, 1
        %s520 = scalar_lea.sflag [#allocation3], %s519
        %s521 = sand.u32 %s337, 1
        %s522 = smul.addr %s521, 64
        %s523 = scalar_lea.vmem [#allocation2], %s522
        %s524 = smul.u32 %s31, 8
        %s525 = ssub.s32 %s524, 1
        %p526 = scmp.gt.s32.totalorder %s525, 0
        %s527 = scalar_select %p526, %s525, 0
        %p528 = scmp.lt.s32.totalorder %s30, 1
        %s529 = scalar_select %p528, %s30, 1
        %p530 = scmp.lt.s32.totalorder %s527, 15
        %s531 = scalar_select %p530, %s527, 15
        %s532 = smul.addr %s531, 2
        %s533 = smul.addr %s529, 32
        %s534 = sadd.s32 %s532, %s533
        %s535 = smul.addr %s534, 4
        %s536 = scalar_lea.vmem %s0, %s535
        %s537 = smul.u32 %s31, 8
        %s538 = ssub.s32 %s537, 1
        %p539 = scmp.gt.s32.totalorder %s538, 0
        %s540 = scalar_select %p539, %s538, 0
        %s541 = smul.u32 8, %s31
        %p542 = scmp.lt.s32.totalorder %s30, 1
        %s543 = scalar_select %p542, %s30, 1
        %p544 = scmp.lt.s32.totalorder %s541, 15
        %s545 = scalar_select %p544, %s541, 15
        %s546 = smul.addr %s545, 2
        %s547 = smul.addr %s543, 32
        %s548 = sadd.s32 %s546, %s547
        %s549 = smul.addr %s548, 4
        %s550 = scalar_lea.vmem %s1, %s549
        %s551 = smul.u32 8, %s31
        %s552 = smul.u32 %s31, 8
        %s553 = sadd.s32 %s552, 8
        %p554 = scmp.lt.s32.totalorder %s553, 15
        %s555 = scalar_select %p554, %s553, 15
        %p556 = scmp.lt.s32.totalorder %s30, 1
        %s557 = scalar_select %p556, %s30, 1
        %p558 = scmp.lt.s32.totalorder %s555, 15
        %s559 = scalar_select %p558, %s555, 15
        %s560 = smul.addr %s559, 2
        %s561 = smul.addr %s557, 32
        %s562 = sadd.s32 %s560, %s561
        %s563 = smul.addr %s562, 4
        %s564 = scalar_lea.vmem %s2, %s563
        %s565 = smul.u32 %s31, 8
        %s566 = sadd.s32 %s565, 8
        %p567 = scmp.lt.s32.totalorder %s566, 15
        %s568 = scalar_select %p567, %s566, 15
        %s569 = smul.u32 8, %s31
        %v571 = vld [vmem:[%s536] sm:$0xf]
        %v572 = vld [vmem:[%s536 + $0x4] sm:$0xf]
        %v573 = vld [vmem:[%s550] sm:$0xf]
        %v574 = vld [vmem:[%s550 + $0x4] sm:$0xf]
        %v575 = vld [vmem:[%s550 + $0x8] sm:$0xf]
        %v576 = vld [vmem:[%s550 + $0xc] sm:$0xf]
        %v577 = vld [vmem:[%s550 + $0x10] sm:$0xf]
        %v578 = vld [vmem:[%s550 + $0x14] sm:$0xf]
        %v579 = vld [vmem:[%s550 + $0x18] sm:$0xf]
        %v580 = vld [vmem:[%s550 + $0x1c] sm:$0xf]
        %v581 = vld [vmem:[%s550 + $0x20] sm:$0xf]
        %v582 = vld [vmem:[%s550 + $0x24] sm:$0xf]
        %v583 = vld [vmem:[%s550 + $0x28] sm:$0xf]
        %v584 = vld [vmem:[%s550 + $0x2c] sm:$0xf]
        %v585 = vld [vmem:[%s550 + $0x30] sm:$0xf]
        %v586 = vld [vmem:[%s550 + $0x34] sm:$0xf]
        %v587 = vld [vmem:[%s550 + $0x38] sm:$0xf]
        %v588 = vld [vmem:[%s550 + $0x3c] sm:$0xf]
        %v589 = vld [vmem:[%s564] sm:$0xf]
        %v590 = vld [vmem:[%s564 + $0x4] sm:$0xf]
        %v591 = vld [vmem:[%s3] sm:$0xf]
        %v592 = vld [vmem:[%s3 + $0x4] sm:$0xf]
        %v593 = vld [vmem:[%s3 + $0x8] sm:$0xf]
        %v594 = vld [vmem:[%s3 + $0xc] sm:$0xf]
        %v595 = vld [vmem:[%s3 + $0x10] sm:$0xf]
        %v596 = vld [vmem:[%s3 + $0x14] sm:$0xf]
        %v597 = vld [vmem:[%s3 + $0x18] sm:$0xf]
        %v598 = vld [vmem:[%s3 + $0x1c] sm:$0xf]
        %v599 = vld [vmem:[%s3 + $0x20] sm:$0xf]
        %v600 = vld [vmem:[%s3 + $0x24] sm:$0xf]
        %v601 = vld [vmem:[%s3 + $0x28] sm:$0xf]
        %v602 = vld [vmem:[%s3 + $0x2c] sm:$0xf]
        %v603 = vld [vmem:[%s3 + $0x30] sm:$0xf]
        %v604 = vld [vmem:[%s3 + $0x34] sm:$0xf]
        %v605 = vld [vmem:[%s3 + $0x38] sm:$0xf]
        %v606 = vld [vmem:[%s3 + $0x3c] sm:$0xf]
        %v627 = vunpack.c.l.b16 %v571
        %v628 = vunpack.c.l.b16 %v572
        %v629 = vunpack.c.l.b16 %v573
        %v630 = vunpack.c.l.b16 %v574
        %v631 = vunpack.c.l.b16 %v575
        %v632 = vunpack.c.l.b16 %v576
        %v633 = vunpack.c.l.b16 %v577
        %v634 = vunpack.c.l.b16 %v578
        %v635 = vunpack.c.l.b16 %v579
        %v636 = vunpack.c.l.b16 %v580
        %v637 = vunpack.c.l.b16 %v581
        %v638 = vunpack.c.l.b16 %v582
        %v639 = vunpack.c.l.b16 %v583
        %v640 = vunpack.c.l.b16 %v584
        %v641 = vunpack.c.l.b16 %v585
        %v642 = vunpack.c.l.b16 %v586
        %v643 = vunpack.c.l.b16 %v587
        %v644 = vunpack.c.l.b16 %v588
        %v645 = vunpack.c.l.b16 %v589
        %v646 = vunpack.c.l.b16 %v590
        %v647 = vpack.c.b16 %v628, %v627
        %v648 = vpack.c.b16 %v630, %v629
        %v649 = vpack.c.b16 %v632, %v631
        %v650 = vpack.c.b16 %v634, %v633
        %v651 = vpack.c.b16 %v636, %v635
        %v652 = vpack.c.b16 %v638, %v637
        %v653 = vpack.c.b16 %v640, %v639
        %v654 = vpack.c.b16 %v642, %v641
        %v655 = vpack.c.b16 %v644, %v643
        %v656 = vpack.c.b16 %v646, %v645
        %v683 = vunpack.c.l.b16 %v591
        %v684 = vunpack.c.l.b16 %v592
        %v685 = vunpack.c.l.b16 %v593
        %v686 = vunpack.c.l.b16 %v594
        %v687 = vunpack.c.l.b16 %v595
        %v688 = vunpack.c.l.b16 %v596
        %v689 = vunpack.c.l.b16 %v597
        %v690 = vunpack.c.l.b16 %v598
        %v691 = vunpack.c.l.b16 %v599
        %v692 = vunpack.c.l.b16 %v600
        %v693 = vunpack.c.l.b16 %v601
        %v694 = vunpack.c.l.b16 %v602
        %v695 = vunpack.c.l.b16 %v603
        %v696 = vunpack.c.l.b16 %v604
        %v697 = vunpack.c.l.b16 %v605
        %v698 = vunpack.c.l.b16 %v606
        %v699 = vpack.c.b16 %v684, %v683
        %v700 = vpack.c.b16 %v686, %v685
        %v701 = vpack.c.b16 %v688, %v687
        %v702 = vpack.c.b16 %v690, %v689
        %v703 = vpack.c.b16 %v692, %v691
        %v704 = vpack.c.b16 %v694, %v693
        %v705 = vpack.c.b16 %v696, %v695
        %v706 = vpack.c.b16 %v698, %v697
        %715 = vmatprep.subr.bf16.mxu0 0
        %716 = vmatpush1.bf16.msra.mxu0 %v706
        %717 = vmatprep.subr.bf16.mxu0 0
        %718 = vmatpush1.bf16.msra.mxu0 %v705
        %719 = vmatprep.subr.bf16.mxu0 0
        %720 = vmatpush1.bf16.msra.mxu0 %v704
        %721 = vmatprep.subr.bf16.mxu0 0
        %722 = vmatpush1.bf16.msra.mxu0 %v703
        %723 = vmatprep.subr.bf16.mxu0 0
        %724 = vmatpush1.bf16.msra.mxu0 %v702
        %725 = vmatprep.subr.bf16.mxu0 0
        %726 = vmatpush1.bf16.msra.mxu0 %v701
        %727 = vmatprep.subr.bf16.mxu0 0
        %728 = vmatpush1.bf16.msra.mxu0 %v700
        %729 = vmatprep.subr.bf16.mxu0 0
        %730 = vmatpush1.bf16.msra.mxu0 %v699
        %731 = vmatprep.subr.bf16.mxu0 0
        %732 = vmatpush2.bf16.msra.mxu0 0
        %733 = vmatprep.subr.bf16.mxu0 0
        %734 = vmatpush2.bf16.msra.mxu0 0
        %735 = vmatprep.subr.bf16.mxu0 0
        %736 = vmatpush2.bf16.msra.mxu0 0
        %737 = vmatprep.subr.bf16.mxu0 0
        %738 = vmatpush2.bf16.msra.mxu0 0
        %739 = vmatprep.subr.bf16.mxu0 0
        %740 = vmatpush2.bf16.msra.mxu0 0
        %741 = vmatprep.subr.bf16.mxu0 0
        %742 = vmatpush2.bf16.msra.mxu0 0
        %743 = vmatprep.subr.bf16.mxu0 0
        %744 = vmatpush2.bf16.msra.mxu0 0
        %745 = vmatprep.subr.bf16.mxu0 0
        %746 = vmatpush2.bf16.msra.mxu0 0
        %747 = vmatprep.mubr.bf16.mxu0 0
        %748 = vmatmul.mubr.bf16.gmra.mxu0 %v647
        %v749 = vpop.f32.mrf.mxu0
        %v750 = vadd.f32 0.0, %v749
        %v751 = vpop.f32.mrf.mxu0
        %v752 = vpop.f32.mrf.mxu0
        %v753 = vadd.f32 0.0, %v752
        %v754 = vpop.f32.mrf.mxu0
        %755 = vmatprep.mubr.bf16.mxu0 0
        %756 = vmatmul.mubr.bf16.gmra.mxu0 %v648
        %v757 = vpop.f32.mrf.mxu0
        %v758 = vadd.f32 0.0, %v757
        %v759 = vpop.f32.mrf.mxu0
        %v760 = vpop.f32.mrf.mxu0
        %v761 = vadd.f32 0.0, %v760
        %v762 = vpop.f32.mrf.mxu0
        %763 = vmatprep.mubr.bf16.mxu0 0
        %764 = vmatmul.mubr.bf16.gmra.mxu0 %v649
        %v765 = vpop.f32.mrf.mxu0
        %v766 = vadd.f32 0.0, %v765
        %v767 = vpop.f32.mrf.mxu0
        %v768 = vpop.f32.mrf.mxu0
        %v769 = vadd.f32 0.0, %v768
        %v770 = vpop.f32.mrf.mxu0
        %771 = vmatprep.mubr.bf16.mxu0 0
        %772 = vmatmul.mubr.bf16.gmra.mxu0 %v650
        %v773 = vpop.f32.mrf.mxu0
        %v774 = vadd.f32 0.0, %v773
        %v775 = vpop.f32.mrf.mxu0
        %v776 = vpop.f32.mrf.mxu0
        %v777 = vadd.f32 0.0, %v776
        %v778 = vpop.f32.mrf.mxu0
        %779 = vmatprep.mubr.bf16.mxu0 0
        %780 = vmatmul.mubr.bf16.gmra.mxu0 %v651
        %v781 = vpop.f32.mrf.mxu0
        %v782 = vadd.f32 0.0, %v781
        %v783 = vpop.f32.mrf.mxu0
        %v784 = vpop.f32.mrf.mxu0
        %v785 = vadd.f32 0.0, %v784
        %v786 = vpop.f32.mrf.mxu0
        %787 = vmatprep.mubr.bf16.mxu0 0
        %788 = vmatmul.mubr.bf16.gmra.mxu0 %v652
        %v789 = vpop.f32.mrf.mxu0
        %v790 = vadd.f32 0.0, %v789
        %v791 = vpop.f32.mrf.mxu0
        %v792 = vpop.f32.mrf.mxu0
        %v793 = vadd.f32 0.0, %v792
        %v794 = vpop.f32.mrf.mxu0
        %795 = vmatprep.mubr.bf16.mxu0 0
        %796 = vmatmul.mubr.bf16.gmra.mxu0 %v653
        %v797 = vpop.f32.mrf.mxu0
        %v798 = vadd.f32 0.0, %v797
        %v799 = vpop.f32.mrf.mxu0
        %v800 = vpop.f32.mrf.mxu0
        %v801 = vadd.f32 0.0, %v800
        %v802 = vpop.f32.mrf.mxu0
        %803 = vmatprep.mubr.bf16.mxu0 0
        %804 = vmatmul.mubr.bf16.gmra.mxu0 %v654
        %v805 = vpop.f32.mrf.mxu0
        %v806 = vadd.f32 0.0, %v805
        %v807 = vpop.f32.mrf.mxu0
        %v808 = vpop.f32.mrf.mxu0
        %v809 = vadd.f32 0.0, %v808
        %v810 = vpop.f32.mrf.mxu0
        %811 = vmatprep.mubr.bf16.mxu0 0
        %812 = vmatmul.mubr.bf16.gmra.mxu0 %v655
        %v813 = vpop.f32.mrf.mxu0
        %v814 = vadd.f32 0.0, %v813
        %v815 = vpop.f32.mrf.mxu0
        %v816 = vpop.f32.mrf.mxu0
        %v817 = vadd.f32 0.0, %v816
        %v818 = vpop.f32.mrf.mxu0
        %819 = vmatprep.mubr.bf16.mxu0 0
        %820 = vmatmul.mubr.bf16.gmra.mxu0 %v656
        %v821 = vpop.f32.mrf.mxu0
        %v822 = vadd.f32 0.0, %v821
        %v823 = vpop.f32.mrf.mxu0
        %v824 = vpop.f32.mrf.mxu0
        %v825 = vadd.f32 0.0, %v824
        %v826 = vpop.f32.mrf.mxu0
        %827 = vdwg.mxu0
        %v828 = vld [vmem:[%s4] sm:$0x1]
        %v830 = vlaneseq
        %v831 = vshrl.u32 %v830, 7
        %v832 = vsub.s32 0, %v831
        %v833 = vrot.slane %v828, %v832
        %v835 = vmul.f32 %v750, %v833
        %v836 = vmul.f32 %v753, %v833
        %v837 = vmul.f32 %v758, %v833
        %v838 = vmul.f32 %v761, %v833
        %v839 = vmul.f32 %v766, %v833
        %v840 = vmul.f32 %v769, %v833
        %v841 = vmul.f32 %v774, %v833
        %v842 = vmul.f32 %v777, %v833
        %v843 = vmul.f32 %v782, %v833
        %v844 = vmul.f32 %v785, %v833
        %v845 = vmul.f32 %v790, %v833
        %v846 = vmul.f32 %v793, %v833
        %v847 = vmul.f32 %v798, %v833
        %v848 = vmul.f32 %v801, %v833
        %v849 = vmul.f32 %v806, %v833
        %v850 = vmul.f32 %v809, %v833
        %v851 = vmul.f32 %v814, %v833
        %v852 = vmul.f32 %v817, %v833
        %v853 = vmul.f32 %v822, %v833
        %v854 = vmul.f32 %v825, %v833
        %v855 = vld [vmem:[%s5] sm:$0x1]
        %v857 = vlaneseq
        %v858 = vshrl.u32 %v857, 7
        %v859 = vsub.s32 0, %v858
        %v860 = vrot.slane %v855, %v859
        %v862 = vadd.f32 %v835, %v860
        %v863 = vadd.f32 %v836, %v860
        %v864 = vadd.f32 %v837, %v860
        %v865 = vadd.f32 %v838, %v860
        %v866 = vadd.f32 %v839, %v860
        %v867 = vadd.f32 %v840, %v860
        %v868 = vadd.f32 %v841, %v860
        %v869 = vadd.f32 %v842, %v860
        %v870 = vadd.f32 %v843, %v860
        %v871 = vadd.f32 %v844, %v860
        %v872 = vadd.f32 %v845, %v860
        %v873 = vadd.f32 %v846, %v860
        %v874 = vadd.f32 %v847, %v860
        %v875 = vadd.f32 %v848, %v860
        %v876 = vadd.f32 %v849, %v860
        %v877 = vadd.f32 %v850, %v860
        %v878 = vadd.f32 %v851, %v860
        %v879 = vadd.f32 %v852, %v860
        %v880 = vadd.f32 %v853, %v860
        %v881 = vadd.f32 %v854, %v860
        %v882 = vmax.f32 %v862, 0.0
        %v883 = vmax.f32 %v863, 0.0
        %v884 = vmax.f32 %v864, 0.0
        %v885 = vmax.f32 %v865, 0.0
        %v886 = vmax.f32 %v866, 0.0
        %v887 = vmax.f32 %v867, 0.0
        %v888 = vmax.f32 %v868, 0.0
        %v889 = vmax.f32 %v869, 0.0
        %v890 = vmax.f32 %v870, 0.0
        %v891 = vmax.f32 %v871, 0.0
        %v892 = vmax.f32 %v872, 0.0
        %v893 = vmax.f32 %v873, 0.0
        %v894 = vmax.f32 %v874, 0.0
        %v895 = vmax.f32 %v875, 0.0
        %v896 = vmax.f32 %v876, 0.0
        %v897 = vmax.f32 %v877, 0.0
        %v898 = vmax.f32 %v878, 0.0
        %v899 = vmax.f32 %v879, 0.0
        %v900 = vmax.f32 %v880, 0.0
        %v901 = vmax.f32 %v881, 0.0
        %v902 = vpack.c.bf16 %v883, %v882
        %v903 = vpack.c.bf16 %v885, %v884
        %v904 = vpack.c.bf16 %v887, %v886
        %v905 = vpack.c.bf16 %v889, %v888
        %v906 = vpack.c.bf16 %v891, %v890
        %v907 = vpack.c.bf16 %v893, %v892
        %v908 = vpack.c.bf16 %v895, %v894
        %v909 = vpack.c.bf16 %v897, %v896
        %v910 = vpack.c.bf16 %v899, %v898
        %v911 = vpack.c.bf16 %v901, %v900
        %p912 = scmp.gt.s32.totalorder %s31, 0
        %s913 = scalar_select %p912, 1, 0
        %v914 = vstv %s913
        %vm915 = vcmp.eq.s32.totalorder %v914, 1
        %p916 = scmp.lt.s32.totalorder %s31, 1
        %s917 = scalar_select %p916, 1, 0
        %v918 = vstv %s917
        %vm919 = vcmp.eq.s32.totalorder %v918, 1
        %v920 = vsel %vm915, 1, 0
        %v921 = vsel %vm919, 1, 0
        %v922 = vcvt.s32.f32 %v920
        %v923 = vcvt.s32.f32 1
        %v924 = vcvt.s32.f32 %v921
        %v925 = vpack.c.bf16 %v922, %v922
        %v926 = vpack.c.bf16 %v923, %v923
        %v927 = vpack.c.bf16 %v924, %v924
        %v928 = vmul.bf16 %v902, %v925
        %v929 = vmul.bf16 %v903, %v926
        %v930 = vmul.bf16 %v904, %v926
        %v931 = vmul.bf16 %v905, %v926
        %v932 = vmul.bf16 %v906, %v926
        %v933 = vmul.bf16 %v907, %v926
        %v934 = vmul.bf16 %v908, %v926
        %v935 = vmul.bf16 %v909, %v926
        %v936 = vmul.bf16 %v910, %v926
        %v937 = vmul.bf16 %v911, %v927
        %v939 = vshrl.u32 %v928, 16
        %v941 = vrot.slane %v939, 7
        %v942 = vshll.u32 %v928, 16
        %v944 = vor.u32 %v941, %v942
        %v946 = vshrl.u32 %v929, 16
        %v948 = vrot.slane %v946, 7
        %v949 = vshll.u32 %v929, 16
        %v951 = vor.u32 %v948, %v949
        %v953 = vshrl.u32 %v930, 16
        %v955 = vrot.slane %v953, 7
        %v956 = vshll.u32 %v930, 16
        %v958 = vor.u32 %v955, %v956
        %v960 = vshrl.u32 %v931, 16
        %v962 = vrot.slane %v960, 7
        %v963 = vshll.u32 %v931, 16
        %v965 = vor.u32 %v962, %v963
        %v967 = vshrl.u32 %v932, 16
        %v969 = vrot.slane %v967, 7
        %v970 = vshll.u32 %v932, 16
        %v972 = vor.u32 %v969, %v970
        %v974 = vshrl.u32 %v933, 16
        %v976 = vrot.slane %v974, 7
        %v977 = vshll.u32 %v933, 16
        %v979 = vor.u32 %v976, %v977
        %v981 = vshrl.u32 %v934, 16
        %v983 = vrot.slane %v981, 7
        %v984 = vshll.u32 %v934, 16
        %v986 = vor.u32 %v983, %v984
        %v988 = vshrl.u32 %v935, 16
        %v990 = vrot.slane %v988, 7
        %v991 = vshll.u32 %v935, 16
        %v993 = vor.u32 %v990, %v991
        %v995 = vshrl.u32 %v936, 16
        %v997 = vrot.slane %v995, 7
        %v998 = vshll.u32 %v936, 16
        %v1000 = vor.u32 %v997, %v998
        %v1002 = vshrl.u32 %v937, 16
        %v1004 = vrot.slane %v1002, 7
        %v1005 = vshll.u32 %v937, 16
        %v1007 = vor.u32 %v1004, %v1005
        %vm1028 = vcmask 1040384
        %vm1029 = vsmask.f32 256
        %vm1030 = vmand %vm1028, %vm1029
        %v1031 = vsel %vm1030, 0, %v944
        %v1032 = vsel %vm1030, 0, %v951
        %v1033 = vsel %vm1030, 0, %v958
        %v1034 = vsel %vm1030, 0, %v965
        %v1035 = vsel %vm1030, 0, %v972
        %v1036 = vsel %vm1030, 0, %v979
        %v1037 = vsel %vm1030, 0, %v986
        %v1038 = vsel %vm1030, 0, %v993
        %v1039 = vsel %vm1030, 0, %v1000
        %v1040 = vsel %vm1030, 0, %v1007
        %v1041 = vsel %vm1030, %v941, 0
        %v1042 = vsel %vm1030, %v948, 0
        %v1043 = vsel %vm1030, %v955, 0
        %v1044 = vsel %vm1030, %v962, 0
        %v1045 = vsel %vm1030, %v969, 0
        %v1046 = vsel %vm1030, %v976, 0
        %v1047 = vsel %vm1030, %v983, 0
        %v1048 = vsel %vm1030, %v990, 0
        %v1049 = vsel %vm1030, %v997, 0
        %v1050 = vsel %vm1030, %v1004, 0
        %vm1051 = vsmask.f32 7424
        %v1053 = vshrl.u32 %v1031, 16
        %v1055 = vshll.u32 %v1031, 16
        %v1057 = vrot.slane %v1055, 1
        %v1058 = vor.u32 %v1053, %v1057
        %v1060 = vshll.u32 %v1041, 16
        %v1062 = vrot.slane %v1060, 1
        %v1063 = vsel %vm1051, %v1058, %v1062
        %v1065 = vshrl.u32 %v1032, 16
        %v1067 = vshll.u32 %v1032, 16
        %v1069 = vrot.slane %v1067, 1
        %v1070 = vor.u32 %v1065, %v1069
        %v1072 = vshll.u32 %v1042, 16
        %v1074 = vrot.slane %v1072, 1
        %v1075 = vsel %vm1051, %v1070, %v1074
        %v1077 = vshrl.u32 %v1033, 16
        %v1079 = vshll.u32 %v1033, 16
        %v1081 = vrot.slane %v1079, 1
        %v1082 = vor.u32 %v1077, %v1081
        %v1084 = vshll.u32 %v1043, 16
        %v1086 = vrot.slane %v1084, 1
        %v1087 = vsel %vm1051, %v1082, %v1086
        %v1089 = vshrl.u32 %v1034, 16
        %v1091 = vshll.u32 %v1034, 16
        %v1093 = vrot.slane %v1091, 1
        %v1094 = vor.u32 %v1089, %v1093
        %v1096 = vshll.u32 %v1044, 16
        %v1098 = vrot.slane %v1096, 1
        %v1099 = vsel %vm1051, %v1094, %v1098
        %v1101 = vshrl.u32 %v1035, 16
        %v1103 = vshll.u32 %v1035, 16
        %v1105 = vrot.slane %v1103, 1
        %v1106 = vor.u32 %v1101, %v1105
        %v1108 = vshll.u32 %v1045, 16
        %v1110 = vrot.slane %v1108, 1
        %v1111 = vsel %vm1051, %v1106, %v1110
        %v1113 = vshrl.u32 %v1036, 16
        %v1115 = vshll.u32 %v1036, 16
        %v1117 = vrot.slane %v1115, 1
        %v1118 = vor.u32 %v1113, %v1117
        %v1120 = vshll.u32 %v1046, 16
        %v1122 = vrot.slane %v1120, 1
        %v1123 = vsel %vm1051, %v1118, %v1122
        %v1125 = vshrl.u32 %v1037, 16
        %v1127 = vshll.u32 %v1037, 16
        %v1129 = vrot.slane %v1127, 1
        %v1130 = vor.u32 %v1125, %v1129
        %v1132 = vshll.u32 %v1047, 16
        %v1134 = vrot.slane %v1132, 1
        %v1135 = vsel %vm1051, %v1130, %v1134
        %v1137 = vshrl.u32 %v1038, 16
        %v1139 = vshll.u32 %v1038, 16
        %v1141 = vrot.slane %v1139, 1
        %v1142 = vor.u32 %v1137, %v1141
        %v1144 = vshll.u32 %v1048, 16
        %v1146 = vrot.slane %v1144, 1
        %v1147 = vsel %vm1051, %v1142, %v1146
        %v1149 = vshrl.u32 %v1039, 16
        %v1151 = vshll.u32 %v1039, 16
        %v1153 = vrot.slane %v1151, 1
        %v1154 = vor.u32 %v1149, %v1153
        %v1156 = vshll.u32 %v1049, 16
        %v1158 = vrot.slane %v1156, 1
        %v1159 = vsel %vm1051, %v1154, %v1158
        %v1161 = vshrl.u32 %v1040, 16
        %v1163 = vshll.u32 %v1040, 16
        %v1165 = vrot.slane %v1163, 1
        %v1166 = vor.u32 %v1161, %v1165
        %v1168 = vshll.u32 %v1050, 16
        %v1170 = vrot.slane %v1168, 1
        %v1171 = vsel %vm1051, %v1166, %v1170
        %1172 = vrot.lane.b32.xlu0 %v1063, 32
        %v1173 = vpop.permute.xlu0 %1172
        %1174 = vrot.lane.b32.xlu0 %v1075, 32
        %v1175 = vpop.permute.xlu0 %1174
        %1176 = vrot.lane.b32.xlu0 %v1087, 32
        %v1177 = vpop.permute.xlu0 %1176
        %1178 = vrot.lane.b32.xlu0 %v1099, 32
        %v1179 = vpop.permute.xlu0 %1178
        %1180 = vrot.lane.b32.xlu0 %v1111, 32
        %v1181 = vpop.permute.xlu0 %1180
        %1182 = vrot.lane.b32.xlu0 %v1123, 32
        %v1183 = vpop.permute.xlu0 %1182
        %1184 = vrot.lane.b32.xlu0 %v1135, 32
        %v1185 = vpop.permute.xlu0 %1184
        %1186 = vrot.lane.b32.xlu0 %v1147, 32
        %v1187 = vpop.permute.xlu0 %1186
        %1188 = vrot.lane.b32.xlu0 %v1159, 32
        %v1189 = vpop.permute.xlu0 %1188
        %1190 = vrot.lane.b32.xlu0 %v1171, 32
        %v1191 = vpop.permute.xlu0 %1190
        %vm1212 = vcmask 1046528
        %v1213 = vrot.slane %v1031, 1
        %v1214 = vrot.slane %v1041, 1
        %v1215 = vsel %vm1212, %v1213, %v1214
        %v1216 = vrot.slane %v1032, 1
        %v1217 = vrot.slane %v1042, 1
        %v1218 = vsel %vm1212, %v1216, %v1217
        %v1219 = vrot.slane %v1033, 1
        %v1220 = vrot.slane %v1043, 1
        %v1221 = vsel %vm1212, %v1219, %v1220
        %v1222 = vrot.slane %v1034, 1
        %v1223 = vrot.slane %v1044, 1
        %v1224 = vsel %vm1212, %v1222, %v1223
        %v1225 = vrot.slane %v1035, 1
        %v1226 = vrot.slane %v1045, 1
        %v1227 = vsel %vm1212, %v1225, %v1226
        %v1228 = vrot.slane %v1036, 1
        %v1229 = vrot.slane %v1046, 1
        %v1230 = vsel %vm1212, %v1228, %v1229
        %v1231 = vrot.slane %v1037, 1
        %v1232 = vrot.slane %v1047, 1
        %v1233 = vsel %vm1212, %v1231, %v1232
        %v1234 = vrot.slane %v1038, 1
        %v1235 = vrot.slane %v1048, 1
        %v1236 = vsel %vm1212, %v1234, %v1235
        %v1237 = vrot.slane %v1039, 1
        %v1238 = vrot.slane %v1049, 1
        %v1239 = vsel %vm1212, %v1237, %v1238
        %v1240 = vrot.slane %v1040, 1
        %v1241 = vrot.slane %v1050, 1
        %v1242 = vsel %vm1212, %v1240, %v1241
        %1243 = vrot.lane.b32.xlu0 %v1215, 64
        %v1244 = vpop.permute.xlu0 %1243
        %1245 = vrot.lane.b32.xlu0 %v1218, 64
        %v1246 = vpop.permute.xlu0 %1245
        %1247 = vrot.lane.b32.xlu0 %v1221, 64
        %v1248 = vpop.permute.xlu0 %1247
        %1249 = vrot.lane.b32.xlu0 %v1224, 64
        %v1250 = vpop.permute.xlu0 %1249
        %1251 = vrot.lane.b32.xlu0 %v1227, 64
        %v1252 = vpop.permute.xlu0 %1251
        %1253 = vrot.lane.b32.xlu0 %v1230, 64
        %v1254 = vpop.permute.xlu0 %1253
        %1255 = vrot.lane.b32.xlu0 %v1233, 64
        %v1256 = vpop.permute.xlu0 %1255
        %1257 = vrot.lane.b32.xlu0 %v1236, 64
        %v1258 = vpop.permute.xlu0 %1257
        %1259 = vrot.lane.b32.xlu0 %v1239, 64
        %v1260 = vpop.permute.xlu0 %1259
        %1261 = vrot.lane.b32.xlu0 %v1242, 64
        %v1262 = vpop.permute.xlu0 %1261
        %vm1263 = vcmask 261120
        %v1265 = vsel %vm1263, %v1031, %v1173
        %v1267 = vsel %vm1263, %v1032, %v1175
        %v1269 = vsel %vm1263, %v1033, %v1177
        %v1271 = vsel %vm1263, %v1034, %v1179
        %v1273 = vsel %vm1263, %v1035, %v1181
        %v1275 = vsel %vm1263, %v1036, %v1183
        %v1277 = vsel %vm1263, %v1037, %v1185
        %v1279 = vsel %vm1263, %v1038, %v1187
        %v1281 = vsel %vm1263, %v1039, %v1189
        %v1283 = vsel %vm1263, %v1040, %v1191
        %vm1284 = vcmask 523264
        %v1286 = vsel %vm1284, %v1265, %v1244
        %v1288 = vsel %vm1284, %v1267, %v1246
        %v1290 = vsel %vm1284, %v1269, %v1248
        %v1292 = vsel %vm1284, %v1271, %v1250
        %v1294 = vsel %vm1284, %v1273, %v1252
        %v1296 = vsel %vm1284, %v1275, %v1254
        %v1298 = vsel %vm1284, %v1277, %v1256
        %v1300 = vsel %vm1284, %v1279, %v1258
        %v1302 = vsel %vm1284, %v1281, %v1260
        %v1304 = vsel %vm1284, %v1283, %v1262
        %v1305 = vld [vmem:[%s6] sm:$0xf]
        %v1306 = vld [vmem:[%s6 + $0x4] sm:$0xf]
        %v1307 = vld [vmem:[%s6 + $0x8] sm:$0xf]
        %v1308 = vld [vmem:[%s6 + $0xc] sm:$0xf]
        %v1309 = vld [vmem:[%s6 + $0x10] sm:$0xf]
        %v1310 = vld [vmem:[%s6 + $0x14] sm:$0xf]
        %v1311 = vld [vmem:[%s6 + $0x18] sm:$0xf]
        %v1312 = vld [vmem:[%s6 + $0x1c] sm:$0xf]
        %v1313 = vld [vmem:[%s6 + $0x20] sm:$0xf]
        %v1314 = vld [vmem:[%s6 + $0x24] sm:$0xf]
        %v1315 = vld [vmem:[%s6 + $0x28] sm:$0xf]
        %v1316 = vld [vmem:[%s6 + $0x2c] sm:$0xf]
        %s1317 = scalar_lea.vmem %s6, 48
        %v1318 = vld [vmem:[%s1317] sm:$0xf]
        %v1319 = vld [vmem:[%s1317 + $0x4] sm:$0xf]
        %v1320 = vld [vmem:[%s1317 + $0x8] sm:$0xf]
        %v1321 = vld [vmem:[%s1317 + $0xc] sm:$0xf]
        %v1322 = vld [vmem:[%s1317 + $0x10] sm:$0xf]
        %v1323 = vld [vmem:[%s1317 + $0x14] sm:$0xf]
        %v1324 = vld [vmem:[%s1317 + $0x18] sm:$0xf]
        %v1325 = vld [vmem:[%s1317 + $0x1c] sm:$0xf]
        %v1326 = vld [vmem:[%s1317 + $0x20] sm:$0xf]
        %v1327 = vld [vmem:[%s1317 + $0x24] sm:$0xf]
        %v1328 = vld [vmem:[%s1317 + $0x28] sm:$0xf]
        %v1329 = vld [vmem:[%s1317 + $0x2c] sm:$0xf]
        %v1342 = vunpack.c.l.b16 %v1318
        %v1343 = vunpack.c.l.b16 %v1319
        %v1344 = vunpack.c.l.b16 %v1320
        %v1345 = vunpack.c.l.b16 %v1321
        %v1346 = vunpack.c.l.b16 %v1322
        %v1347 = vunpack.c.l.b16 %v1323
        %v1348 = vunpack.c.l.b16 %v1324
        %v1349 = vunpack.c.l.b16 %v1325
        %v1350 = vunpack.c.l.b16 %v1326
        %v1351 = vunpack.c.l.b16 %v1327
        %v1352 = vunpack.c.l.b16 %v1328
        %v1353 = vunpack.c.l.b16 %v1329
        %v1354 = vpack.c.b16 %v1343, %v1342
        %v1355 = vpack.c.b16 %v1345, %v1344
        %v1356 = vpack.c.b16 %v1347, %v1346
        %v1357 = vpack.c.b16 %v1349, %v1348
        %v1358 = vpack.c.b16 %v1351, %v1350
        %v1359 = vpack.c.b16 %v1353, %v1352
        %vm1366 = vcmask 785408
        %v1367 = vsel %vm1366, %v1288, 0
        %v1369 = vsel %vm1366, %v1290, 0
        %v1371 = vsel %vm1366, %v1292, 0
        %v1373 = vsel %vm1366, %v1294, 0
        %v1375 = vsel %vm1366, %v1296, 0
        %v1377 = vsel %vm1366, %v1298, 0
        %v1379 = vsel %vm1366, %v1300, 0
        %v1381 = vsel %vm1366, %v1302, 0
        %1383 = vmatprep.subr.bf16.mxu0 0
        %1384 = vmatpush1.bf16.msra.mxu0 0
        %1385 = vmatprep.subr.bf16.mxu0 0
        %1386 = vmatpush1.bf16.msra.mxu0 0
        %1387 = vmatprep.subr.bf16.mxu0 0
        %1388 = vmatpush1.bf16.msra.mxu0 %v1359
        %1389 = vmatprep.subr.bf16.mxu0 0
        %1390 = vmatpush1.bf16.msra.mxu0 %v1358
        %1391 = vmatprep.subr.bf16.mxu0 0
        %1392 = vmatpush1.bf16.msra.mxu0 %v1357
        %1393 = vmatprep.subr.bf16.mxu0 0
        %1394 = vmatpush1.bf16.msra.mxu0 %v1356
        %1395 = vmatprep.subr.bf16.mxu0 0
        %1396 = vmatpush1.bf16.msra.mxu0 %v1355
        %1397 = vmatprep.subr.bf16.mxu0 0
        %1398 = vmatpush1.bf16.msra.mxu0 %v1354
        %1399 = vmatprep.subr.bf16.mxu0 0
        %1400 = vmatpush2.bf16.msra.mxu0 0
        %1401 = vmatprep.subr.bf16.mxu0 0
        %1402 = vmatpush2.bf16.msra.mxu0 0
        %1403 = vmatprep.subr.bf16.mxu0 0
        %1404 = vmatpush2.bf16.msra.mxu0 0
        %1405 = vmatprep.subr.bf16.mxu0 0
        %1406 = vmatpush2.bf16.msra.mxu0 0
        %1407 = vmatprep.subr.bf16.mxu0 0
        %1408 = vmatpush2.bf16.msra.mxu0 0
        %1409 = vmatprep.subr.bf16.mxu0 0
        %1410 = vmatpush2.bf16.msra.mxu0 0
        %1411 = vmatprep.subr.bf16.mxu0 0
        %1412 = vmatpush2.bf16.msra.mxu0 0
        %1413 = vmatprep.subr.bf16.mxu0 0
        %1414 = vmatpush2.bf16.msra.mxu0 0
        %1415 = vmatprep.mubr.bf16.mxu0 0
        %1416 = vmatmul.mubr.bf16.gmra.mxu0 %v1367
        %v1417 = vpop.f32.mrf.mxu0
        %v1418 = vadd.f32 0.0, %v1417
        %v1419 = vpop.f32.mrf.mxu0
        %v1420 = vpop.f32.mrf.mxu0
        %v1421 = vadd.f32 0.0, %v1420
        %v1422 = vpop.f32.mrf.mxu0
        %1423 = vmatprep.mubr.bf16.mxu0 0
        %1424 = vmatmul.mubr.bf16.gmra.mxu0 %v1369
        %v1425 = vpop.f32.mrf.mxu0
        %v1426 = vadd.f32 0.0, %v1425
        %v1427 = vpop.f32.mrf.mxu0
        %v1428 = vpop.f32.mrf.mxu0
        %v1429 = vadd.f32 0.0, %v1428
        %v1430 = vpop.f32.mrf.mxu0
        %1431 = vmatprep.mubr.bf16.mxu0 0
        %1432 = vmatmul.mubr.bf16.gmra.mxu0 %v1371
        %v1433 = vpop.f32.mrf.mxu0
        %v1434 = vadd.f32 0.0, %v1433
        %v1435 = vpop.f32.mrf.mxu0
        %v1436 = vpop.f32.mrf.mxu0
        %v1437 = vadd.f32 0.0, %v1436
        %v1438 = vpop.f32.mrf.mxu0
        %1439 = vmatprep.mubr.bf16.mxu0 0
        %1440 = vmatmul.mubr.bf16.gmra.mxu0 %v1373
        %v1441 = vpop.f32.mrf.mxu0
        %v1442 = vadd.f32 0.0, %v1441
        %v1443 = vpop.f32.mrf.mxu0
        %v1444 = vpop.f32.mrf.mxu0
        %v1445 = vadd.f32 0.0, %v1444
        %v1446 = vpop.f32.mrf.mxu0
        %1447 = vmatprep.mubr.bf16.mxu0 0
        %1448 = vmatmul.mubr.bf16.gmra.mxu0 %v1375
        %v1449 = vpop.f32.mrf.mxu0
        %v1450 = vadd.f32 0.0, %v1449
        %v1451 = vpop.f32.mrf.mxu0
        %v1452 = vpop.f32.mrf.mxu0
        %v1453 = vadd.f32 0.0, %v1452
        %v1454 = vpop.f32.mrf.mxu0
        %1455 = vmatprep.mubr.bf16.mxu0 0
        %1456 = vmatmul.mubr.bf16.gmra.mxu0 %v1377
        %v1457 = vpop.f32.mrf.mxu0
        %v1458 = vadd.f32 0.0, %v1457
        %v1459 = vpop.f32.mrf.mxu0
        %v1460 = vpop.f32.mrf.mxu0
        %v1461 = vadd.f32 0.0, %v1460
        %v1462 = vpop.f32.mrf.mxu0
        %1463 = vmatprep.mubr.bf16.mxu0 0
        %1464 = vmatmul.mubr.bf16.gmra.mxu0 %v1379
        %v1465 = vpop.f32.mrf.mxu0
        %v1466 = vadd.f32 0.0, %v1465
        %v1467 = vpop.f32.mrf.mxu0
        %v1468 = vpop.f32.mrf.mxu0
        %v1469 = vadd.f32 0.0, %v1468
        %v1470 = vpop.f32.mrf.mxu0
        %1471 = vmatprep.mubr.bf16.mxu0 0
        %1472 = vmatmul.mubr.bf16.gmra.mxu0 %v1381
        %v1473 = vpop.f32.mrf.mxu0
        %v1474 = vadd.f32 0.0, %v1473
        %v1475 = vpop.f32.mrf.mxu0
        %v1476 = vpop.f32.mrf.mxu0
        %v1477 = vadd.f32 0.0, %v1476
        %v1478 = vpop.f32.mrf.mxu0
        %1479 = vdwg.mxu0
        %v1492 = vunpack.c.l.b16 %v1305
        %v1493 = vunpack.c.l.b16 %v1306
        %v1494 = vunpack.c.l.b16 %v1307
        %v1495 = vunpack.c.l.b16 %v1308
        %v1496 = vunpack.c.l.b16 %v1309
        %v1497 = vunpack.c.l.b16 %v1310
        %v1498 = vunpack.c.l.b16 %v1311
        %v1499 = vunpack.c.l.b16 %v1312
        %v1500 = vunpack.c.l.b16 %v1313
        %v1501 = vunpack.c.l.b16 %v1314
        %v1502 = vunpack.c.l.b16 %v1315
        %v1503 = vunpack.c.l.b16 %v1316
        %v1504 = vpack.c.b16 %v1493, %v1492
        %v1505 = vpack.c.b16 %v1495, %v1494
        %v1506 = vpack.c.b16 %v1497, %v1496
        %v1507 = vpack.c.b16 %v1499, %v1498
        %v1508 = vpack.c.b16 %v1501, %v1500
        %v1509 = vpack.c.b16 %v1503, %v1502
        %v1516 = vsel %vm1366, %v1286, 0
        %1518 = vmatprep.subr.bf16.mxu0 0
        %1519 = vmatpush1.bf16.msra.mxu0 0
        %1520 = vmatprep.subr.bf16.mxu0 0
        %1521 = vmatpush1.bf16.msra.mxu0 0
        %1522 = vmatprep.subr.bf16.mxu0 0
        %1523 = vmatpush1.bf16.msra.mxu0 %v1509
        %1524 = vmatprep.subr.bf16.mxu0 0
        %1525 = vmatpush1.bf16.msra.mxu0 %v1508
        %1526 = vmatprep.subr.bf16.mxu0 0
        %1527 = vmatpush1.bf16.msra.mxu0 %v1507
        %1528 = vmatprep.subr.bf16.mxu0 0
        %1529 = vmatpush1.bf16.msra.mxu0 %v1506
        %1530 = vmatprep.subr.bf16.mxu0 0
        %1531 = vmatpush1.bf16.msra.mxu0 %v1505
        %1532 = vmatprep.subr.bf16.mxu0 0
        %1533 = vmatpush1.bf16.msra.mxu0 %v1504
        %1534 = vmatprep.subr.bf16.mxu0 0
        %1535 = vmatpush2.bf16.msra.mxu0 0
        %1536 = vmatprep.subr.bf16.mxu0 0
        %1537 = vmatpush2.bf16.msra.mxu0 0
        %1538 = vmatprep.subr.bf16.mxu0 0
        %1539 = vmatpush2.bf16.msra.mxu0 0
        %1540 = vmatprep.subr.bf16.mxu0 0
        %1541 = vmatpush2.bf16.msra.mxu0 0
        %1542 = vmatprep.subr.bf16.mxu0 0
        %1543 = vmatpush2.bf16.msra.mxu0 0
        %1544 = vmatprep.subr.bf16.mxu0 0
        %1545 = vmatpush2.bf16.msra.mxu0 0
        %1546 = vmatprep.subr.bf16.mxu0 0
        %1547 = vmatpush2.bf16.msra.mxu0 0
        %1548 = vmatprep.subr.bf16.mxu0 0
        %1549 = vmatpush2.bf16.msra.mxu0 0
        %1550 = vmatprep.mubr.bf16.mxu0 0
        %1551 = vmatmul.mubr.bf16.gmra.mxu0 %v1516
        %v1552 = vpop.f32.mrf.mxu0
        %v1553 = vadd.f32 %v1418, %v1552
        %v1554 = vpop.f32.mrf.mxu0
        %v1555 = vpop.f32.mrf.mxu0
        %v1556 = vadd.f32 %v1421, %v1555
        %v1557 = vpop.f32.mrf.mxu0
        %1558 = vmatprep.mubr.bf16.mxu0 0
        %1559 = vmatmul.mubr.bf16.gmra.mxu0 %v1367
        %v1560 = vpop.f32.mrf.mxu0
        %v1561 = vadd.f32 %v1426, %v1560
        %v1562 = vpop.f32.mrf.mxu0
        %v1563 = vpop.f32.mrf.mxu0
        %v1564 = vadd.f32 %v1429, %v1563
        %v1565 = vpop.f32.mrf.mxu0
        %1566 = vmatprep.mubr.bf16.mxu0 0
        %1567 = vmatmul.mubr.bf16.gmra.mxu0 %v1369
        %v1568 = vpop.f32.mrf.mxu0
        %v1569 = vadd.f32 %v1434, %v1568
        %v1570 = vpop.f32.mrf.mxu0
        %v1571 = vpop.f32.mrf.mxu0
        %v1572 = vadd.f32 %v1437, %v1571
        %v1573 = vpop.f32.mrf.mxu0
        %1574 = vmatprep.mubr.bf16.mxu0 0
        %1575 = vmatmul.mubr.bf16.gmra.mxu0 %v1371
        %v1576 = vpop.f32.mrf.mxu0
        %v1577 = vadd.f32 %v1442, %v1576
        %v1578 = vpop.f32.mrf.mxu0
        %v1579 = vpop.f32.mrf.mxu0
        %v1580 = vadd.f32 %v1445, %v1579
        %v1581 = vpop.f32.mrf.mxu0
        %1582 = vmatprep.mubr.bf16.mxu0 0
        %1583 = vmatmul.mubr.bf16.gmra.mxu0 %v1373
        %v1584 = vpop.f32.mrf.mxu0
        %v1585 = vadd.f32 %v1450, %v1584
        %v1586 = vpop.f32.mrf.mxu0
        %v1587 = vpop.f32.mrf.mxu0
        %v1588 = vadd.f32 %v1453, %v1587
        %v1589 = vpop.f32.mrf.mxu0
        %1590 = vmatprep.mubr.bf16.mxu0 0
        %1591 = vmatmul.mubr.bf16.gmra.mxu0 %v1375
        %v1592 = vpop.f32.mrf.mxu0
        %v1593 = vadd.f32 %v1458, %v1592
        %v1594 = vpop.f32.mrf.mxu0
        %v1595 = vpop.f32.mrf.mxu0
        %v1596 = vadd.f32 %v1461, %v1595
        %v1597 = vpop.f32.mrf.mxu0
        %1598 = vmatprep.mubr.bf16.mxu0 0
        %1599 = vmatmul.mubr.bf16.gmra.mxu0 %v1377
        %v1600 = vpop.f32.mrf.mxu0
        %v1601 = vadd.f32 %v1466, %v1600
        %v1602 = vpop.f32.mrf.mxu0
        %v1603 = vpop.f32.mrf.mxu0
        %v1604 = vadd.f32 %v1469, %v1603
        %v1605 = vpop.f32.mrf.mxu0
        %1606 = vmatprep.mubr.bf16.mxu0 0
        %1607 = vmatmul.mubr.bf16.gmra.mxu0 %v1379
        %v1608 = vpop.f32.mrf.mxu0
        %v1609 = vadd.f32 %v1474, %v1608
        %v1610 = vpop.f32.mrf.mxu0
        %v1611 = vpop.f32.mrf.mxu0
        %v1612 = vadd.f32 %v1477, %v1611
        %v1613 = vpop.f32.mrf.mxu0
        %1614 = vdwg.mxu0
        %s1615 = scalar_lea.vmem %s6, 96
        %v1616 = vld [vmem:[%s1615] sm:$0xf]
        %v1617 = vld [vmem:[%s1615 + $0x4] sm:$0xf]
        %v1618 = vld [vmem:[%s1615 + $0x8] sm:$0xf]
        %v1619 = vld [vmem:[%s1615 + $0xc] sm:$0xf]
        %v1620 = vld [vmem:[%s1615 + $0x10] sm:$0xf]
        %v1621 = vld [vmem:[%s1615 + $0x14] sm:$0xf]
        %v1622 = vld [vmem:[%s1615 + $0x18] sm:$0xf]
        %v1623 = vld [vmem:[%s1615 + $0x1c] sm:$0xf]
        %v1624 = vld [vmem:[%s1615 + $0x20] sm:$0xf]
        %v1625 = vld [vmem:[%s1615 + $0x24] sm:$0xf]
        %v1626 = vld [vmem:[%s1615 + $0x28] sm:$0xf]
        %v1627 = vld [vmem:[%s1615 + $0x2c] sm:$0xf]
        %v1640 = vunpack.c.l.b16 %v1616
        %v1641 = vunpack.c.l.b16 %v1617
        %v1642 = vunpack.c.l.b16 %v1618
        %v1643 = vunpack.c.l.b16 %v1619
        %v1644 = vunpack.c.l.b16 %v1620
        %v1645 = vunpack.c.l.b16 %v1621
        %v1646 = vunpack.c.l.b16 %v1622
        %v1647 = vunpack.c.l.b16 %v1623
        %v1648 = vunpack.c.l.b16 %v1624
        %v1649 = vunpack.c.l.b16 %v1625
        %v1650 = vunpack.c.l.b16 %v1626
        %v1651 = vunpack.c.l.b16 %v1627
        %v1652 = vpack.c.b16 %v1641, %v1640
        %v1653 = vpack.c.b16 %v1643, %v1642
        %v1654 = vpack.c.b16 %v1645, %v1644
        %v1655 = vpack.c.b16 %v1647, %v1646
        %v1656 = vpack.c.b16 %v1649, %v1648
        %v1657 = vpack.c.b16 %v1651, %v1650
        %v1664 = vsel %vm1366, %v1304, 0
        %1666 = vmatprep.subr.bf16.mxu0 0
        %1667 = vmatpush1.bf16.msra.mxu0 0
        %1668 = vmatprep.subr.bf16.mxu0 0
        %1669 = vmatpush1.bf16.msra.mxu0 0
        %1670 = vmatprep.subr.bf16.mxu0 0
        %1671 = vmatpush1.bf16.msra.mxu0 %v1657
        %1672 = vmatprep.subr.bf16.mxu0 0
        %1673 = vmatpush1.bf16.msra.mxu0 %v1656
        %1674 = vmatprep.subr.bf16.mxu0 0
        %1675 = vmatpush1.bf16.msra.mxu0 %v1655
        %1676 = vmatprep.subr.bf16.mxu0 0
        %1677 = vmatpush1.bf16.msra.mxu0 %v1654
        %1678 = vmatprep.subr.bf16.mxu0 0
        %1679 = vmatpush1.bf16.msra.mxu0 %v1653
        %1680 = vmatprep.subr.bf16.mxu0 0
        %1681 = vmatpush1.bf16.msra.mxu0 %v1652
        %1682 = vmatprep.subr.bf16.mxu0 0
        %1683 = vmatpush2.bf16.msra.mxu0 0
        %1684 = vmatprep.subr.bf16.mxu0 0
        %1685 = vmatpush2.bf16.msra.mxu0 0
        %1686 = vmatprep.subr.bf16.mxu0 0
        %1687 = vmatpush2.bf16.msra.mxu0 0
        %1688 = vmatprep.subr.bf16.mxu0 0
        %1689 = vmatpush2.bf16.msra.mxu0 0
        %1690 = vmatprep.subr.bf16.mxu0 0
        %1691 = vmatpush2.bf16.msra.mxu0 0
        %1692 = vmatprep.subr.bf16.mxu0 0
        %1693 = vmatpush2.bf16.msra.mxu0 0
        %1694 = vmatprep.subr.bf16.mxu0 0
        %1695 = vmatpush2.bf16.msra.mxu0 0
        %1696 = vmatprep.subr.bf16.mxu0 0
        %1697 = vmatpush2.bf16.msra.mxu0 0
        %1698 = vmatprep.mubr.bf16.mxu0 0
        %1699 = vmatmul.mubr.bf16.gmra.mxu0 %v1369
        %v1700 = vpop.f32.mrf.mxu0
        %v1701 = vadd.f32 0.0, %v1700
        %v1702 = vpop.f32.mrf.mxu0
        %v1703 = vpop.f32.mrf.mxu0
        %v1704 = vadd.f32 0.0, %v1703
        %v1705 = vpop.f32.mrf.mxu0
        %1706 = vmatprep.mubr.bf16.mxu0 0
        %1707 = vmatmul.mubr.bf16.gmra.mxu0 %v1371
        %v1708 = vpop.f32.mrf.mxu0
        %v1709 = vadd.f32 0.0, %v1708
        %v1710 = vpop.f32.mrf.mxu0
        %v1711 = vpop.f32.mrf.mxu0
        %v1712 = vadd.f32 0.0, %v1711
        %v1713 = vpop.f32.mrf.mxu0
        %1714 = vmatprep.mubr.bf16.mxu0 0
        %1715 = vmatmul.mubr.bf16.gmra.mxu0 %v1373
        %v1716 = vpop.f32.mrf.mxu0
        %v1717 = vadd.f32 0.0, %v1716
        %v1718 = vpop.f32.mrf.mxu0
        %v1719 = vpop.f32.mrf.mxu0
        %v1720 = vadd.f32 0.0, %v1719
        %v1721 = vpop.f32.mrf.mxu0
        %1722 = vmatprep.mubr.bf16.mxu0 0
        %1723 = vmatmul.mubr.bf16.gmra.mxu0 %v1375
        %v1724 = vpop.f32.mrf.mxu0
        %v1725 = vadd.f32 0.0, %v1724
        %v1726 = vpop.f32.mrf.mxu0
        %v1727 = vpop.f32.mrf.mxu0
        %v1728 = vadd.f32 0.0, %v1727
        %v1729 = vpop.f32.mrf.mxu0
        %1730 = vmatprep.mubr.bf16.mxu0 0
        %1731 = vmatmul.mubr.bf16.gmra.mxu0 %v1377
        %v1732 = vpop.f32.mrf.mxu0
        %v1733 = vadd.f32 0.0, %v1732
        %v1734 = vpop.f32.mrf.mxu0
        %v1735 = vpop.f32.mrf.mxu0
        %v1736 = vadd.f32 0.0, %v1735
        %v1737 = vpop.f32.mrf.mxu0
        %1738 = vmatprep.mubr.bf16.mxu0 0
        %1739 = vmatmul.mubr.bf16.gmra.mxu0 %v1379
        %v1740 = vpop.f32.mrf.mxu0
        %v1741 = vadd.f32 0.0, %v1740
        %v1742 = vpop.f32.mrf.mxu0
        %v1743 = vpop.f32.mrf.mxu0
        %v1744 = vadd.f32 0.0, %v1743
        %v1745 = vpop.f32.mrf.mxu0
        %1746 = vmatprep.mubr.bf16.mxu0 0
        %1747 = vmatmul.mubr.bf16.gmra.mxu0 %v1381
        %v1748 = vpop.f32.mrf.mxu0
        %v1749 = vadd.f32 0.0, %v1748
        %v1750 = vpop.f32.mrf.mxu0
        %v1751 = vpop.f32.mrf.mxu0
        %v1752 = vadd.f32 0.0, %v1751
        %v1753 = vpop.f32.mrf.mxu0
        %1754 = vmatprep.mubr.bf16.mxu0 0
        %1755 = vmatmul.mubr.bf16.gmra.mxu0 %v1664
        %v1756 = vpop.f32.mrf.mxu0
        %v1757 = vadd.f32 0.0, %v1756
        %v1758 = vpop.f32.mrf.mxu0
        %v1759 = vpop.f32.mrf.mxu0
        %v1760 = vadd.f32 0.0, %v1759
        %v1761 = vpop.f32.mrf.mxu0
        %1762 = vdwg.mxu0
        %v1763 = vadd.f32 %v1553, %v1701
        %v1764 = vadd.f32 %v1556, %v1704
        %v1765 = vadd.f32 %v1561, %v1709
        %v1766 = vadd.f32 %v1564, %v1712
        %v1767 = vadd.f32 %v1569, %v1717
        %v1768 = vadd.f32 %v1572, %v1720
        %v1769 = vadd.f32 %v1577, %v1725
        %v1770 = vadd.f32 %v1580, %v1728
        %v1771 = vadd.f32 %v1585, %v1733
        %v1772 = vadd.f32 %v1588, %v1736
        %v1773 = vadd.f32 %v1593, %v1741
        %v1774 = vadd.f32 %v1596, %v1744
        %v1775 = vadd.f32 %v1601, %v1749
        %v1776 = vadd.f32 %v1604, %v1752
        %v1777 = vadd.f32 %v1609, %v1757
        %v1778 = vadd.f32 %v1612, %v1760
        %v1779 = vld [vmem:[%s7] sm:$0x1]
        %v1781 = vlaneseq
        %v1782 = vshrl.u32 %v1781, 7
        %v1783 = vsub.s32 0, %v1782
        %v1784 = vrot.slane %v1779, %v1783
        %v1786 = vmul.f32 %v1763, %v1784
        %v1787 = vmul.f32 %v1764, %v1784
        %v1788 = vmul.f32 %v1765, %v1784
        %v1789 = vmul.f32 %v1766, %v1784
        %v1790 = vmul.f32 %v1767, %v1784
        %v1791 = vmul.f32 %v1768, %v1784
        %v1792 = vmul.f32 %v1769, %v1784
        %v1793 = vmul.f32 %v1770, %v1784
        %v1794 = vmul.f32 %v1771, %v1784
        %v1795 = vmul.f32 %v1772, %v1784
        %v1796 = vmul.f32 %v1773, %v1784
        %v1797 = vmul.f32 %v1774, %v1784
        %v1798 = vmul.f32 %v1775, %v1784
        %v1799 = vmul.f32 %v1776, %v1784
        %v1800 = vmul.f32 %v1777, %v1784
        %v1801 = vmul.f32 %v1778, %v1784
        %v1802 = vld [vmem:[%s8] sm:$0x1]
        %v1804 = vlaneseq
        %v1805 = vshrl.u32 %v1804, 7
        %v1806 = vsub.s32 0, %v1805
        %v1807 = vrot.slane %v1802, %v1806
        %v1809 = vadd.f32 %v1786, %v1807
        %v1810 = vadd.f32 %v1787, %v1807
        %v1811 = vadd.f32 %v1788, %v1807
        %v1812 = vadd.f32 %v1789, %v1807
        %v1813 = vadd.f32 %v1790, %v1807
        %v1814 = vadd.f32 %v1791, %v1807
        %v1815 = vadd.f32 %v1792, %v1807
        %v1816 = vadd.f32 %v1793, %v1807
        %v1817 = vadd.f32 %v1794, %v1807
        %v1818 = vadd.f32 %v1795, %v1807
        %v1819 = vadd.f32 %v1796, %v1807
        %v1820 = vadd.f32 %v1797, %v1807
        %v1821 = vadd.f32 %v1798, %v1807
        %v1822 = vadd.f32 %v1799, %v1807
        %v1823 = vadd.f32 %v1800, %v1807
        %v1824 = vadd.f32 %v1801, %v1807
        %v1825 = vmax.f32 %v1809, 0.0
        %v1826 = vmax.f32 %v1810, 0.0
        %v1827 = vmax.f32 %v1811, 0.0
        %v1828 = vmax.f32 %v1812, 0.0
        %v1829 = vmax.f32 %v1813, 0.0
        %v1830 = vmax.f32 %v1814, 0.0
        %v1831 = vmax.f32 %v1815, 0.0
        %v1832 = vmax.f32 %v1816, 0.0
        %v1833 = vmax.f32 %v1817, 0.0
        %v1834 = vmax.f32 %v1818, 0.0
        %v1835 = vmax.f32 %v1819, 0.0
        %v1836 = vmax.f32 %v1820, 0.0
        %v1837 = vmax.f32 %v1821, 0.0
        %v1838 = vmax.f32 %v1822, 0.0
        %v1839 = vmax.f32 %v1823, 0.0
        %v1840 = vmax.f32 %v1824, 0.0
        %v1841 = vpack.c.bf16 %v1826, %v1825
        %v1842 = vpack.c.bf16 %v1828, %v1827
        %v1843 = vpack.c.bf16 %v1830, %v1829
        %v1844 = vpack.c.bf16 %v1832, %v1831
        %v1845 = vpack.c.bf16 %v1834, %v1833
        %v1846 = vpack.c.bf16 %v1836, %v1835
        %v1847 = vpack.c.bf16 %v1838, %v1837
        %v1848 = vpack.c.bf16 %v1840, %v1839
        %v1849 = vld [vmem:[%s9] sm:$0xf]
        %v1850 = vld [vmem:[%s9 + $0x4] sm:$0xf]
        %v1851 = vld [vmem:[%s9 + $0x8] sm:$0xf]
        %v1852 = vld [vmem:[%s9 + $0xc] sm:$0xf]
        %v1857 = vunpack.c.l.b16 %v1849
        %v1858 = vunpack.c.l.b16 %v1850
        %v1859 = vunpack.c.l.b16 %v1851
        %v1860 = vunpack.c.l.b16 %v1852
        %v1861 = vpack.c.b16 %v1858, %v1857
        %v1862 = vpack.c.b16 %v1860, %v1859
        %v1866 = vsel %vm1263, %v1841, 0
        %v1869 = vsel %vm1263, %v1842, 0
        %v1872 = vsel %vm1263, %v1843, 0
        %v1875 = vsel %vm1263, %v1844, 0
        %v1878 = vsel %vm1263, %v1845, 0
        %v1881 = vsel %vm1263, %v1846, 0
        %v1884 = vsel %vm1263, %v1847, 0
        %v1887 = vsel %vm1263, %v1848, 0
        %1889 = vmatprep.subr.bf16.mxu0 0
        %1890 = vmatpush1.bf16.msra.mxu0 0
        %1891 = vmatprep.subr.bf16.mxu0 0
        %1892 = vmatpush1.bf16.msra.mxu0 0
        %1893 = vmatprep.subr.bf16.mxu0 0
        %1894 = vmatpush1.bf16.msra.mxu0 0
        %1895 = vmatprep.subr.bf16.mxu0 0
        %1896 = vmatpush1.bf16.msra.mxu0 0
        %1897 = vmatprep.subr.bf16.mxu0 0
        %1898 = vmatpush1.bf16.msra.mxu0 0
        %1899 = vmatprep.subr.bf16.mxu0 0
        %1900 = vmatpush1.bf16.msra.mxu0 0
        %1901 = vmatprep.subr.bf16.mxu0 0
        %1902 = vmatpush1.bf16.msra.mxu0 %v1862
        %1903 = vmatprep.subr.bf16.mxu0 0
        %1904 = vmatpush1.bf16.msra.mxu0 %v1861
        %1905 = vmatprep.subr.bf16.mxu0 0
        %1906 = vmatpush2.bf16.msra.mxu0 0
        %1907 = vmatprep.subr.bf16.mxu0 0
        %1908 = vmatpush2.bf16.msra.mxu0 0
        %1909 = vmatprep.subr.bf16.mxu0 0
        %1910 = vmatpush2.bf16.msra.mxu0 0
        %1911 = vmatprep.subr.bf16.mxu0 0
        %1912 = vmatpush2.bf16.msra.mxu0 0
        %1913 = vmatprep.subr.bf16.mxu0 0
        %1914 = vmatpush2.bf16.msra.mxu0 0
        %1915 = vmatprep.subr.bf16.mxu0 0
        %1916 = vmatpush2.bf16.msra.mxu0 0
        %1917 = vmatprep.subr.bf16.mxu0 0
        %1918 = vmatpush2.bf16.msra.mxu0 0
        %1919 = vmatprep.subr.bf16.mxu0 0
        %1920 = vmatpush2.bf16.msra.mxu0 0
        %1921 = vmatprep.mubr.bf16.mxu0 0
        %1922 = vmatmul.mubr.bf16.gmra.mxu0 %v1866
        %v1923 = vpop.f32.mrf.mxu0
        %v1924 = vadd.f32 0.0, %v1923
        %v1925 = vpop.f32.mrf.mxu0
        %v1926 = vpop.f32.mrf.mxu0
        %v1927 = vadd.f32 0.0, %v1926
        %v1928 = vpop.f32.mrf.mxu0
        %1929 = vmatprep.mubr.bf16.mxu0 0
        %1930 = vmatmul.mubr.bf16.gmra.mxu0 %v1869
        %v1931 = vpop.f32.mrf.mxu0
        %v1932 = vadd.f32 0.0, %v1931
        %v1933 = vpop.f32.mrf.mxu0
        %v1934 = vpop.f32.mrf.mxu0
        %v1935 = vadd.f32 0.0, %v1934
        %v1936 = vpop.f32.mrf.mxu0
        %1937 = vmatprep.mubr.bf16.mxu0 0
        %1938 = vmatmul.mubr.bf16.gmra.mxu0 %v1872
        %v1939 = vpop.f32.mrf.mxu0
        %v1940 = vadd.f32 0.0, %v1939
        %v1941 = vpop.f32.mrf.mxu0
        %v1942 = vpop.f32.mrf.mxu0
        %v1943 = vadd.f32 0.0, %v1942
        %v1944 = vpop.f32.mrf.mxu0
        %1945 = vmatprep.mubr.bf16.mxu0 0
        %1946 = vmatmul.mubr.bf16.gmra.mxu0 %v1875
        %v1947 = vpop.f32.mrf.mxu0
        %v1948 = vadd.f32 0.0, %v1947
        %v1949 = vpop.f32.mrf.mxu0
        %v1950 = vpop.f32.mrf.mxu0
        %v1951 = vadd.f32 0.0, %v1950
        %v1952 = vpop.f32.mrf.mxu0
        %1953 = vmatprep.mubr.bf16.mxu0 0
        %1954 = vmatmul.mubr.bf16.gmra.mxu0 %v1878
        %v1955 = vpop.f32.mrf.mxu0
        %v1956 = vadd.f32 0.0, %v1955
        %v1957 = vpop.f32.mrf.mxu0
        %v1958 = vpop.f32.mrf.mxu0
        %v1959 = vadd.f32 0.0, %v1958
        %v1960 = vpop.f32.mrf.mxu0
        %1961 = vmatprep.mubr.bf16.mxu0 0
        %1962 = vmatmul.mubr.bf16.gmra.mxu0 %v1881
        %v1963 = vpop.f32.mrf.mxu0
        %v1964 = vadd.f32 0.0, %v1963
        %v1965 = vpop.f32.mrf.mxu0
        %v1966 = vpop.f32.mrf.mxu0
        %v1967 = vadd.f32 0.0, %v1966
        %v1968 = vpop.f32.mrf.mxu0
        %1969 = vmatprep.mubr.bf16.mxu0 0
        %1970 = vmatmul.mubr.bf16.gmra.mxu0 %v1884
        %v1971 = vpop.f32.mrf.mxu0
        %v1972 = vadd.f32 0.0, %v1971
        %v1973 = vpop.f32.mrf.mxu0
        %v1974 = vpop.f32.mrf.mxu0
        %v1975 = vadd.f32 0.0, %v1974
        %v1976 = vpop.f32.mrf.mxu0
        %1977 = vmatprep.mubr.bf16.mxu0 0
        %1978 = vmatmul.mubr.bf16.gmra.mxu0 %v1887
        %v1979 = vpop.f32.mrf.mxu0
        %v1980 = vadd.f32 0.0, %v1979
        %v1981 = vpop.f32.mrf.mxu0
        %v1982 = vpop.f32.mrf.mxu0
        %v1983 = vadd.f32 0.0, %v1982
        %v1984 = vpop.f32.mrf.mxu0
        %1985 = vdwg.mxu0
        %v1986 = vld [vmem:[%s10] sm:$0x1]
        %v1988 = vlaneseq
        %v1989 = vshrl.u32 %v1988, 7
        %v1990 = vsub.s32 0, %v1989
        %v1991 = vrot.slane %v1986, %v1990
        %v1993 = vmul.f32 %v1924, %v1991
        %v1994 = vmul.f32 %v1927, %v1991
        %v1995 = vmul.f32 %v1932, %v1991
        %v1996 = vmul.f32 %v1935, %v1991
        %v1997 = vmul.f32 %v1940, %v1991
        %v1998 = vmul.f32 %v1943, %v1991
        %v1999 = vmul.f32 %v1948, %v1991
        %v2000 = vmul.f32 %v1951, %v1991
        %v2001 = vmul.f32 %v1956, %v1991
        %v2002 = vmul.f32 %v1959, %v1991
        %v2003 = vmul.f32 %v1964, %v1991
        %v2004 = vmul.f32 %v1967, %v1991
        %v2005 = vmul.f32 %v1972, %v1991
        %v2006 = vmul.f32 %v1975, %v1991
        %v2007 = vmul.f32 %v1980, %v1991
        %v2008 = vmul.f32 %v1983, %v1991
        %v2009 = vld [vmem:[%s11] sm:$0x1]
        %v2011 = vlaneseq
        %v2012 = vshrl.u32 %v2011, 7
        %v2013 = vsub.s32 0, %v2012
        %v2014 = vrot.slane %v2009, %v2013
        %v2016 = vadd.f32 %v1993, %v2014
        %v2017 = vadd.f32 %v1994, %v2014
        %v2018 = vadd.f32 %v1995, %v2014
        %v2019 = vadd.f32 %v1996, %v2014
        %v2020 = vadd.f32 %v1997, %v2014
        %v2021 = vadd.f32 %v1998, %v2014
        %v2022 = vadd.f32 %v1999, %v2014
        %v2023 = vadd.f32 %v2000, %v2014
        %v2024 = vadd.f32 %v2001, %v2014
        %v2025 = vadd.f32 %v2002, %v2014
        %v2026 = vadd.f32 %v2003, %v2014
        %v2027 = vadd.f32 %v2004, %v2014
        %v2028 = vadd.f32 %v2005, %v2014
        %v2029 = vadd.f32 %v2006, %v2014
        %v2030 = vadd.f32 %v2007, %v2014
        %v2031 = vadd.f32 %v2008, %v2014
        %v2032 = vunpack.c.l.bf16 %v573
        %v2033 = vunpack.c.l.bf16 %v574
        %v2034 = vunpack.c.l.bf16 %v575
        %v2035 = vunpack.c.l.bf16 %v576
        %v2036 = vunpack.c.l.bf16 %v577
        %v2037 = vunpack.c.l.bf16 %v578
        %v2038 = vunpack.c.l.bf16 %v579
        %v2039 = vunpack.c.l.bf16 %v580
        %v2040 = vunpack.c.l.bf16 %v581
        %v2041 = vunpack.c.l.bf16 %v582
        %v2042 = vunpack.c.l.bf16 %v583
        %v2043 = vunpack.c.l.bf16 %v584
        %v2044 = vunpack.c.l.bf16 %v585
        %v2045 = vunpack.c.l.bf16 %v586
        %v2046 = vunpack.c.l.bf16 %v587
        %v2047 = vunpack.c.l.bf16 %v588
        %v2048 = vadd.f32 %v2016, %v2032
        %v2049 = vadd.f32 %v2017, %v2033
        %v2050 = vadd.f32 %v2018, %v2034
        %v2051 = vadd.f32 %v2019, %v2035
        %v2052 = vadd.f32 %v2020, %v2036
        %v2053 = vadd.f32 %v2021, %v2037
        %v2054 = vadd.f32 %v2022, %v2038
        %v2055 = vadd.f32 %v2023, %v2039
        %v2056 = vadd.f32 %v2024, %v2040
        %v2057 = vadd.f32 %v2025, %v2041
        %v2058 = vadd.f32 %v2026, %v2042
        %v2059 = vadd.f32 %v2027, %v2043
        %v2060 = vadd.f32 %v2028, %v2044
        %v2061 = vadd.f32 %v2029, %v2045
        %v2062 = vadd.f32 %v2030, %v2046
        %v2063 = vadd.f32 %v2031, %v2047
        %v2064 = vmax.f32 %v2048, 0.0
        %v2065 = vmax.f32 %v2049, 0.0
        %v2066 = vmax.f32 %v2050, 0.0
        %v2067 = vmax.f32 %v2051, 0.0
        %v2068 = vmax.f32 %v2052, 0.0
        %v2069 = vmax.f32 %v2053, 0.0
        %v2070 = vmax.f32 %v2054, 0.0
        %v2071 = vmax.f32 %v2055, 0.0
        %v2072 = vmax.f32 %v2056, 0.0
        %v2073 = vmax.f32 %v2057, 0.0
        %v2074 = vmax.f32 %v2058, 0.0
        %v2075 = vmax.f32 %v2059, 0.0
        %v2076 = vmax.f32 %v2060, 0.0
        %v2077 = vmax.f32 %v2061, 0.0
        %v2078 = vmax.f32 %v2062, 0.0
        %v2079 = vmax.f32 %v2063, 0.0
        %v2080 = vpack.c.bf16 %v2065, %v2064
        %v2081 = vpack.c.bf16 %v2067, %v2066
        %v2082 = vpack.c.bf16 %v2069, %v2068
        %v2083 = vpack.c.bf16 %v2071, %v2070
        %v2084 = vpack.c.bf16 %v2073, %v2072
        %v2085 = vpack.c.bf16 %v2075, %v2074
        %v2086 = vpack.c.bf16 %v2077, %v2076
        %v2087 = vpack.c.bf16 %v2079, %v2078
        %v2096 = vunpack.c.l.b16 %v2080
        %v2097 = vunpack.c.h.b16 %v2080
        %v2098 = vunpack.c.l.b16 %v2081
        %v2099 = vunpack.c.h.b16 %v2081
        %v2100 = vunpack.c.l.b16 %v2082
        %v2101 = vunpack.c.h.b16 %v2082
        %v2102 = vunpack.c.l.b16 %v2083
        %v2103 = vunpack.c.h.b16 %v2083
        %v2104 = vunpack.c.l.b16 %v2084
        %v2105 = vunpack.c.h.b16 %v2084
        %v2106 = vunpack.c.l.b16 %v2085
        %v2107 = vunpack.c.h.b16 %v2085
        %v2108 = vunpack.c.l.b16 %v2086
        %v2109 = vunpack.c.h.b16 %v2086
        %v2110 = vunpack.c.l.b16 %v2087
        %v2111 = vunpack.c.h.b16 %v2087
        %v2112 = vpack.c.b16 %v2096, %v2096
        %v2113 = vpack.c.b16 %v2097, %v2097
        %v2114 = vpack.c.b16 %v2098, %v2098
        %v2115 = vpack.c.b16 %v2099, %v2099
        %v2116 = vpack.c.b16 %v2100, %v2100
        %v2117 = vpack.c.b16 %v2101, %v2101
        %v2118 = vpack.c.b16 %v2102, %v2102
        %v2119 = vpack.c.b16 %v2103, %v2103
        %v2120 = vpack.c.b16 %v2104, %v2104
        %v2121 = vpack.c.b16 %v2105, %v2105
        %v2122 = vpack.c.b16 %v2106, %v2106
        %v2123 = vpack.c.b16 %v2107, %v2107
        %v2124 = vpack.c.b16 %v2108, %v2108
        %v2125 = vpack.c.b16 %v2109, %v2109
        %v2126 = vpack.c.b16 %v2110, %v2110
        %v2127 = vpack.c.b16 %v2111, %v2111
        %2144 = vst [vmem:[%s523] sm:$0xf] %v2112
        %2145 = vst [vmem:[%s523 + $0x4] sm:$0xf] %v2113
        %2146 = vst [vmem:[%s523 + $0x8] sm:$0xf] %v2114
        %2147 = vst [vmem:[%s523 + $0xc] sm:$0xf] %v2115
        %2148 = vst [vmem:[%s523 + $0x10] sm:$0xf] %v2116
        %2149 = vst [vmem:[%s523 + $0x14] sm:$0xf] %v2117
        %2150 = vst [vmem:[%s523 + $0x18] sm:$0xf] %v2118
        %2151 = vst [vmem:[%s523 + $0x1c] sm:$0xf] %v2119
        %2152 = vst [vmem:[%s523 + $0x20] sm:$0xf] %v2120
        %2153 = vst [vmem:[%s523 + $0x24] sm:$0xf] %v2121
        %2154 = vst [vmem:[%s523 + $0x28] sm:$0xf] %v2122
        %2155 = vst [vmem:[%s523 + $0x2c] sm:$0xf] %v2123
        %2156 = vst [vmem:[%s523 + $0x30] sm:$0xf] %v2124
        %2157 = vst [vmem:[%s523 + $0x34] sm:$0xf] %v2125
        %2158 = vst [vmem:[%s523 + $0x38] sm:$0xf] %v2126
        %2159 = vst [vmem:[%s523 + $0x3c] sm:$0xf] %v2127
        %s2160 = sand.u32 %s337, 1
        %s2161 = scalar_lea.sflag [#allocation3], %s2160
        %s2162 = sand.u32 %s337, 1
        %s2163 = smul.addr %s2162, 64
        %s2164 = scalar_lea.vmem [#allocation2], %s2163
        // Predicated region
        $region69: #{bottleneck_forward.1} parent=67 // pred_check
          %p2165 = pneg %p347
        $region70: #{bottleneck_forward.1} parent=67 // pred_check_branch
          %2167 = sbr.rel (%p2165) target = $region72
        $region71: #{bottleneck_forward.1} parent=67 // pred_region
          %s2168 = smul.u32 8, %s31
          %s2170 = ssub.s32 1024, 1024
          %2171 = vsyncadd %s2161, %s2170
          %s2172 = smul.addr %s2168, 2
          %s2173 = smul.addr %s30, 32
          %s2174 = sadd.s32 %s2172, %s2173
          %s2175 = smul.addr %s2174, 64
          %s2176 = scalar_lea.hbm %s12, %s2175
          %s2177 = sshll.u32 %s2164, 4
          %s2178 = int_to_ptr.vmem [resolvable:$true] %s2177
          %2183 = dma.vmem_to_hbm [thread:$0]  %s2178, 1024, %s2176, %s2161, 64, 64, 4
        $region72: #{bottleneck_forward.1} parent=67 // pred_fallthru
          _
      $region68: #{bottleneck_forward.1} parent=5 // pred_fallthru
        _
      %p2184 = scmp.le.s32.totalorder 2, %s21
      // Predicated region
      $region73: #{bottleneck_forward.1} parent=5 // pred_check
        %p2185 = pneg %p2184
      $region74: #{bottleneck_forward.1} parent=5 // pred_check_branch
        %2187 = sbr.rel (%p2185) target = $region76
      $region75: #{bottleneck_forward.1} parent=5 // pred_region
        %s2188 = ssub.s32 %s21, 2
        // Predicated region
        $region77: #{bottleneck_forward.1} parent=75 // pred_check
          %p2189 = pneg %p353
        $region78: #{bottleneck_forward.1} parent=75 // pred_check_branch
          %2191 = sbr.rel (%p2189) target = $region80
        $region79: #{bottleneck_forward.1} parent=75 // pred_region
          %s2192 = sand.u32 %s338, 1
          %s2193 = scalar_lea.sflag [#allocation3], %s2192
          %s2194 = sand.u32 %s338, 1
          %s2195 = smul.addr %s2194, 64
          %s2196 = scalar_lea.vmem [#allocation2], %s2195
          %2197 = dma.done %s2193, 1024
        $region80: #{bottleneck_forward.1} parent=75 // pred_fallthru
          _
      $region76: #{bottleneck_forward.1} parent=5 // pred_fallthru
        _
    $region6: #{bottleneck_forward.1} parent=1 // loop_footer
      %s25 = sadd.s32 1, %s21
    $region7: #{bottleneck_forward.1} parent=1 // loop_footer_branch
      %20 = sbr.rel target = $region3
    $region8: #{bottleneck_forward.1} parent=1 // loop_exit
      _
    %2198 = vsyncpa [#allocation3], 1
    %s2199 = scalar_lea.sflag [#allocation3], 1
    %2200 = vsyncpa %s2199, 1

</llo_original>
